<compile_context>
chip_gen: v7x
topology: tpu7x:2x2x1
jax: 0.10.0
libtpu: 0.0.40
codegen_flags: <defaults>
</compile_context>

<pallas_src>
import functools

import jax
import jax.numpy as jnp
import numpy as np
from jax import lax
from jax.experimental import pallas as pl
from jax.experimental.pallas import tpu as pltpu

# ------------- model hyper-params (mirrors HeteGNN.__init__) -------------
INPUT_DIM = 14          # type_embedding vocab
OUTPUT_VOCAB = 2        # output_embedding vocab
NUM_LAYER = 2           # must be >= 2
EMB_DIM = 32
DROP_RATIO = 0.0        # F.dropout(p=0) == identity
GIN_EPS = 0.0           # GINConv default eps (train_eps=False)


# =============================== Pallas kernel ================================
def _hete_gnn_kernel(num_layer,
                     oh_ref, brow_ref, emb_ref, ap_ref, ai_ref,
                     w1_ref, b1_ref, w2p_ref, w2i_ref, b2_ref,
                     out_ref, h_a, h_b, hw1_scr):
    """Fused HeteGNN forward over grid = (layer, A-row-tile).

    oh_ref   [N, 16]   f32  prebuilt one-hot (type | output) indices     (resident)
    brow_ref [1, N]    i32  graph id per node, lane-major                (resident)
    emb_ref  [16, D]   f32  concatenated [type_embedding; output_embedding]
    ap_ref   [TM, N]   bf16 A_pos_hat row tile (streamed)
    ai_ref   [TM, N]   bf16 A_inv_hat row tile (streamed)
    w1_ref   [1, D, 2D]     [W1_pos | W1_inv] for current layer
    b1_ref   [1, 1, 2D]     [b1_pos | b1_inv]
    w2p_ref  [1, D, D], w2i_ref [1, D, D], b2_ref [1, 1, D] (= b2_pos + b2_inv)
    out_ref  [G, 4D]   f32  lane-dense sum|mean|max|min block
    h_a/h_b  [N, D]    f32  ping-pong node features (scratch, persists across grid)
    hw1_scr  [N, 2D]   f32  h @ [W1_pos | W1_inv] for the current layer (scratch)
    """
    l = pl.program_id(0)
    t = pl.program_id(1)
    num_t = pl.num_programs(1)

    tm, n = ap_ref.shape
    d = emb_ref.shape[1]
    g = out_ref.shape[0]

    # ---- layer-0 input: embedding lookup as one one-hot matmul ----
    @pl.when(jnp.logical_and(l == 0, t == 0))
    def _():
        h_a[...] = jnp.dot(oh_ref[...], emb_ref[...],
                           preferred_element_type=jnp.float32)

    # ---- one HeteroConv({'pos','inv'}, aggr='sum') GIN layer, one A row tile ----
    def layer_step(src, dst):
        # reassociated first matmul: hW1 = h @ [W1_pos | W1_inv], once per layer
        @pl.when(t == 0)
        def _():
            hw1_scr[...] = jnp.dot(src[...], w1_ref[0],
                                   preferred_element_type=jnp.float32)

        hw1 = hw1_scr[...]                                   # [N, 2D]
        b1 = b1_ref[...]                                     # [1, 1, 2D]
        # bf16 stream -> f32 compute (lossless: adjacency entries are small integers)
        a_pos = ap_ref[...].astype(jnp.float32)
        a_inv = ai_ref[...].astype(jnp.float32)

        z_pos = jnp.maximum(
            jnp.dot(a_pos, hw1[:, :d], preferred_element_type=jnp.float32)
            + b1[0, :, :d], 0.0)                             # [TM, D]
        z_inv = jnp.maximum(
            jnp.dot(a_inv, hw1[:, d:], preferred_element_type=jnp.float32)
            + b1[0, :, d:], 0.0)                             # [TM, D]

        u = (jnp.dot(z_pos, w2p_ref[0], preferred_element_type=jnp.float32)
             + jnp.dot(z_inv, w2i_ref[0], preferred_element_type=jnp.float32)
             + b2_ref[0])                                    # GIN_pos + GIN_inv + (b2p+b2i)
        # inter-layer ReLU (not on the last layer); dropout p=0 is identity
        u = jnp.where(l < num_layer - 1, jnp.maximum(u, 0.0), u)

        row0 = pl.multiple_of(t * tm, tm)
        dst[pl.ds(row0, tm), :] = u

    @pl.when(l % 2 == 0)
    def _():
        layer_step(h_a, h_b)

    @pl.when(l % 2 == 1)
    def _():
        layer_step(h_b, h_a)

    # ---- MultiAggregation(['sum','mean','max','min']) -> lane-dense [G, 4D] ----
    @pl.when(jnp.logical_and(l == num_layer - 1, t == num_t - 1))
    def _():
        h_fin_ref = h_a if num_layer % 2 == 0 else h_b
        h_fin = h_fin_ref[...]                               # [N, D]

        gid = lax.broadcasted_iota(jnp.int32, (g, n), 0)
        mgn = brow_ref[...] == gid                           # [G, N] bool
        mgn_f = mgn.astype(jnp.float32)

        s = jnp.dot(mgn_f, h_fin, preferred_element_type=jnp.float32)   # [G, D]
        cnt = jnp.sum(mgn_f, axis=1, keepdims=True)                      # [G, 1]
        mean = s / cnt                                       # exact divide (no approx recip)

        h_t = jnp.transpose(h_fin)                           # [D, N]
        mask3 = jnp.broadcast_to(mgn[:, None, :], (g, d, n))
        h3 = jnp.broadcast_to(h_t[None, :, :], (g, d, n))
        mx = jnp.max(jnp.where(mask3, h3, -jnp.inf), axis=-1)            # lane reduce [G, D]
        mn = jnp.min(jnp.where(mask3, h3, jnp.inf), axis=-1)

        out_ref[:, 0 * d:1 * d] = s
        out_ref[:, 1 * d:2 * d] = mean
        out_ref[:, 2 * d:3 * d] = mx
        out_ref[:, 3 * d:4 * d] = mn


# ================================ wrapper =====================================
@functools.partial(jax.jit, static_argnames=("num_graphs", "row_tile"))
def hete_gnn_forward(params, x_int, a_pos_hat, a_inv_hat, batch, *,
                     num_graphs, row_tile=None):
    N = x_int.shape[0]
    D = params["type_embedding"].shape[1]
    G = num_graphs
    L = len(params["layers"])

    TM = row_tile if row_tile is not None else min(N, 256)
    assert N % TM == 0 and (TM % 16 == 0 or TM == N), "bad row tile"
    n_tiles = N // TM

    # --- pack small operands once (tiny XLA glue, folded under jit) ---
    emb_cat = jnp.concatenate([params["type_embedding"],
                               params["output_embedding"]], axis=0)          # [16, D]
    vocab = emb_cat.shape[0]
    cols = jnp.arange(vocab, dtype=jnp.int32)[None, :]
    onehot = jnp.logical_or(cols == x_int[:, 0:1],
                            cols == x_int[:, 1:2] + INPUT_DIM).astype(jnp.float32)  # [N, 16]
    brow = batch.astype(jnp.int32).reshape(1, N)

    # bf16 adjacency stream (small-integer entries -> lossless), f32 compute in-kernel
    a_pos_bf = a_pos_hat.astype(jnp.bfloat16)
    a_inv_bf = a_inv_hat.astype(jnp.bfloat16)

    w1_all = jnp.stack([jnp.concatenate([p["pos"][0], p["inv"][0]], axis=1)
                        for p in params["layers"]])                          # [L, D, 2D]
    b1_all = jnp.stack([jnp.concatenate([p["pos"][1], p["inv"][1]], axis=1)
                        for p in params["layers"]])                          # [L, 1, 2D]
    w2p_all = jnp.stack([p["pos"][2] for p in params["layers"]])             # [L, D, D]
    w2i_all = jnp.stack([p["inv"][2] for p in params["layers"]])             # [L, D, D]
    b2_all = jnp.stack([p["pos"][3] + p["inv"][3] for p in params["layers"]])  # [L, 1, D]

    in_specs = [
        pl.BlockSpec((N, vocab), lambda l, t: (0, 0)),          # onehot      (resident)
        pl.BlockSpec((1, N), lambda l, t: (0, 0)),              # batch row   (resident)
        pl.BlockSpec((vocab, D), lambda l, t: (0, 0)),          # emb table   (resident)
        pl.BlockSpec((TM, N), lambda l, t: (t, 0)),             # A_pos tile  (streamed)
        pl.BlockSpec((TM, N), lambda l, t: (t, 0)),             # A_inv tile  (streamed)
        pl.BlockSpec((1, D, 2 * D), lambda l, t: (l, 0, 0)),    # W1 wide     (per layer)
        pl.BlockSpec((1, 1, 2 * D), lambda l, t: (l, 0, 0)),    # b1 cat
        pl.BlockSpec((1, D, D), lambda l, t: (l, 0, 0)),        # W2 pos
        pl.BlockSpec((1, D, D), lambda l, t: (l, 0, 0)),        # W2 inv
        pl.BlockSpec((1, 1, D), lambda l, t: (l, 0, 0)),        # b2 sum
    ]
    out_spec = pl.BlockSpec((G, 4 * D), lambda l, t: (0, 0))

    flops = (2 * N * vocab * D
             + L * (2 * N * D * (2 * D)            # h @ W1_wide
                    + 2 * (2 * N * N * D)          # A_pos & A_inv passes
                    + 2 * (2 * N * D * D))         # W2 pos & inv
             + 2 * G * N * D)                      # segment-sum matmul
    bytes_accessed = (L * (a_pos_bf.size + a_inv_bf.size) * 2
                      + onehot.size * 4 + brow.size * 4 + emb_cat.size * 4
                      + (w1_all.size + b1_all.size + w2p_all.size
                         + w2i_all.size + b2_all.size) * 4
                      + G * 4 * D * 4)

    h_cat = pl.pallas_call(
        functools.partial(_hete_gnn_kernel, L),
        out_shape=jax.ShapeDtypeStruct((G, 4 * D), jnp.float32),
        grid=(L, n_tiles),
        in_specs=in_specs,
        out_specs=out_spec,
        scratch_shapes=[pltpu.VMEM((N, D), jnp.float32),        # h ping
                        pltpu.VMEM((N, D), jnp.float32),        # h pong
                        pltpu.VMEM((N, 2 * D), jnp.float32)],   # hW1
        compiler_params=pltpu.CompilerParams(
            dimension_semantics=("arbitrary", "arbitrary"),
            vmem_limit_bytes=32 * 1024 * 1024),
        cost_estimate=pl.CostEstimate(flops=int(flops), transcendentals=0,
                                      bytes_accessed=int(bytes_accessed)),
    )(onehot, brow, emb_cat, a_pos_bf, a_inv_bf,
      w1_all, b1_all, w2p_all, w2i_all, b2_all)

    h_graph = h_cat.reshape(G, -1, 4)              # .view(G, -1, 4)   -> [G, D, 4]
    h_graph = jnp.transpose(h_graph, (0, 2, 1))    # .permute(0, 2, 1) -> [G, 4, D]
    batch_mask = jnp.ones((G, 4), dtype=jnp.bool_)
    return h_graph, batch_mask


# ============================ pure-JAX reference ==============================
def reference_forward(params, x_int, a_pos_hat, a_inv_hat, batch, num_graphs):
    h = params["type_embedding"][x_int[:, 0]] + params["output_embedding"][x_int[:, 1]]
    for layer in range(NUM_LAYER):
        def gin(a, p, hh):
            w1, b1, w2, b2 = p
            z = jnp.maximum(jnp.dot(jnp.dot(a, hh, precision="highest"), w1,
                                    precision="highest") + b1, 0.0)
            return jnp.dot(z, w2, precision="highest") + b2
        hn = gin(a_pos_hat, params["layers"][layer]["pos"], h) \
            + gin(a_inv_hat, params["layers"][layer]["inv"], h)
        h = hn if layer == NUM_LAYER - 1 else jnp.maximum(hn, 0.0)
    G = num_graphs
    s = jax.ops.segment_sum(h, batch, num_segments=G)
    cnt = jax.ops.segment_sum(jnp.ones((h.shape[0], 1), jnp.float32), batch, num_segments=G)
    mean = s / cnt
    mx = jax.ops.segment_max(h, batch, num_segments=G)
    mn = jax.ops.segment_min(h, batch, num_segments=G)
    h_graph = jnp.concatenate([s, mean, mx, mn], axis=1)
    return jnp.transpose(h_graph.reshape(G, -1, 4), (0, 2, 1))


# ==================================== main ====================================
if __name__ == "__main__":
    N, G = 32, 2
    E_POS, E_INV = 48, 48
    D = EMB_DIM
    ROW_TILE = 16           # -> grid = (NUM_LAYER, 2); exercises the tiled path

    keys = iter(jax.random.split(jax.random.PRNGKey(0), 32))

    # -------- deterministic parameters (shapes from HeteGNN.__init__) --------
    def xavier(key, shape):
        fan_in, fan_out = shape
        bound = (6.0 / (fan_in + fan_out)) ** 0.5
        return jax.random.uniform(key, shape, jnp.float32, -bound, bound)

    def linear(key, d_in, d_out):
        kw, kb = jax.random.split(key)
        bound = 1.0 / (d_in ** 0.5)
        w = jax.random.uniform(kw, (d_in, d_out), jnp.float32, -bound, bound)
        b = jax.random.uniform(kb, (1, d_out), jnp.float32, -bound, bound)
        return w, b

    params = {
        "type_embedding": xavier(next(keys), (INPUT_DIM, D)),
        "output_embedding": xavier(next(keys), (OUTPUT_VOCAB, D)),
        "layers": [],
    }
    for _ in range(NUM_LAYER):
        layer_p = {}
        for et in ("pos", "inv"):
            w1, b1 = linear(next(keys), D, D)
            w2, b2 = linear(next(keys), D, D)
            layer_p[et] = (w1, b1, w2, b2)
        params["layers"].append(layer_p)

    # ---------------------- deterministic graph data --------------------------
    x_int = jnp.stack(
        [jax.random.randint(next(keys), (N,), 0, INPUT_DIM),
         jax.random.randint(next(keys), (N,), 0, OUTPUT_VOCAB)], axis=1).astype(jnp.int32)
    batch = jnp.concatenate([jnp.zeros(N // 2, jnp.int32),
                             jnp.ones(N - N // 2, jnp.int32)])

    def dense_adj_hat(key, n_edges):
        src = jax.random.randint(key, (n_edges,), 0, N)
        dst = jax.random.randint(jax.random.fold_in(key, 1), (n_edges,), 0, N)
        a = jnp.zeros((N, N), jnp.float32).at[dst, src].add(1.0)    # sum-aggregate
        return a + (1.0 + GIN_EPS) * jnp.eye(N, dtype=jnp.float32)  # GIN self term

    a_pos_hat = dense_adj_hat(next(keys), E_POS)
    a_inv_hat = dense_adj_hat(next(keys), E_INV)

    # --------------------------------- run ------------------------------------
    h_graph, batch_mask = hete_gnn_forward(params, x_int, a_pos_hat, a_inv_hat,
                                           batch, num_graphs=G, row_tile=ROW_TILE)
    h_graph = jax.block_until_ready(h_graph)
    batch_mask = jax.block_until_ready(batch_mask)

    ref = reference_forward(params, x_int, a_pos_hat, a_inv_hat, batch, G)
    np.testing.assert_allclose(np.asarray(h_graph), np.asarray(ref), rtol=1e-4, atol=1e-4)
    assert h_graph.shape == (G, 4, D)
    assert batch_mask.shape == (G, 4) and batch_mask.dtype == jnp.bool_

    print("KERNEL_OK")
</pallas_src>

<mosaic_0001>
module attributes {stable_mosaic.version = 11 : i64} {
  func.func @_hete_gnn_kernel(%arg0: i32, %arg1: i32, %arg2: memref<32x16xf32, #tpu.memory_space<vmem>>, %arg3: memref<1x32xi32, #tpu.memory_space<vmem>>, %arg4: memref<16x32xf32, #tpu.memory_space<vmem>>, %arg5: memref<16x32xbf16, #tpu.memory_space<vmem>>, %arg6: memref<16x32xbf16, #tpu.memory_space<vmem>>, %arg7: memref<1x32x64xf32, #tpu.memory_space<vmem>>, %arg8: memref<1x1x64xf32, #tpu.memory_space<vmem>>, %arg9: memref<1x32x32xf32, #tpu.memory_space<vmem>>, %arg10: memref<1x32x32xf32, #tpu.memory_space<vmem>>, %arg11: memref<1x1x32xf32, #tpu.memory_space<vmem>>, %arg12: memref<2x128xf32, #tpu.memory_space<vmem>>, %arg13: memref<32x32xf32, #tpu.memory_space<vmem>>, %arg14: memref<32x32xf32, #tpu.memory_space<vmem>>, %arg15: memref<32x64xf32, #tpu.memory_space<vmem>>) attributes {dimension_semantics = [#tpu.dimension_semantics<arbitrary>, #tpu.dimension_semantics<arbitrary>], iteration_bounds = array<i64: 2, 2>, scalar_prefetch = 0 : i64, scratch_operands = 3 : i64, tpu.core_type = #tpu.core_type<tc>, window_params = [{pipeline_mode = #tpu.pipeline_mode<synchronous>, transform_indices = @transform_0, window_bounds = array<i64: 32, 16>}, {pipeline_mode = #tpu.pipeline_mode<synchronous>, transform_indices = @transform_1, window_bounds = array<i64: 1, 32>}, {pipeline_mode = #tpu.pipeline_mode<synchronous>, transform_indices = @transform_2, window_bounds = array<i64: 16, 32>}, {transform_indices = @transform_3, window_bounds = array<i64: 16, 32>}, {transform_indices = @transform_4, window_bounds = array<i64: 16, 32>}, {transform_indices = @transform_5, window_bounds = array<i64: 1, 32, 64>}, {transform_indices = @transform_6, window_bounds = array<i64: 1, 1, 64>}, {transform_indices = @transform_7, window_bounds = array<i64: 1, 32, 32>}, {transform_indices = @transform_8, window_bounds = array<i64: 1, 32, 32>}, {transform_indices = @transform_9, window_bounds = array<i64: 1, 1, 32>}, {pipeline_mode = #tpu.pipeline_mode<synchronous>, transform_indices = @transform_10, window_bounds = array<i64: 2, 128>}]} {
    %c0_i32 = arith.constant 0 : i32
    %0 = arith.cmpi eq, %arg0, %c0_i32 : i32
    %c0_i32_0 = arith.constant 0 : i32
    %1 = arith.cmpi eq, %arg1, %c0_i32_0 : i32
    %2 = arith.andi %0, %1 : i1
    %3 = arith.extui %2 : i1 to i32
    %c0_i32_1 = arith.constant 0 : i32
    %4 = arith.cmpi ne, %3, %c0_i32_1 : i32
    scf.if %4 {
      %c0 = arith.constant 0 : index
      %c0_19 = arith.constant 0 : index
      %36 = vector.load %arg2[%c0, %c0_19] : memref<32x16xf32, #tpu.memory_space<vmem>>, vector<32x16xf32>
      %c0_20 = arith.constant 0 : index
      %c0_21 = arith.constant 0 : index
      %37 = vector.load %arg4[%c0_20, %c0_21] : memref<16x32xf32, #tpu.memory_space<vmem>>, vector<16x32xf32>
      %cst = arith.constant dense<0.000000e+00> : vector<32x32xf32>
      %38 = tpu.matmul %36, %37, %cst {dimension_numbers = #tpu.dot_dimension_numbers<[1], [0], [0], [1], [0, 0, 1, 1], [], []>} : vector<32x16xf32>, vector<16x32xf32>, vector<32x32xf32> -> vector<32x32xf32>
      %c0_22 = arith.constant 0 : index
      %c0_23 = arith.constant 0 : index
      %39 = vector.load %arg13[%c0_22, %c0_23] : memref<32x32xf32, #tpu.memory_space<vmem>>, vector<32x32xf32>
      tpu.vector_store %arg13[%c0_22, %c0_23], %38 {strides = array<i32>} : memref<32x32xf32, #tpu.memory_space<vmem>>, vector<32x32xf32>,
    } else {
    }
    %c2_i32 = arith.constant 2 : i32
    %c0_i32_2 = arith.constant 0 : i32
    %5 = arith.cmpi eq, %c2_i32, %c0_i32_2 : i32
    %c1_i32 = arith.constant 1 : i32
    %6 = arith.select %5, %c1_i32, %c2_i32 : i32
    %7 = arith.remsi %arg0, %6 : i32
    %c0_i32_3 = arith.constant 0 : i32
    %8 = arith.cmpi ne, %7, %c0_i32_3 : i32
    %c0_i32_4 = arith.constant 0 : i32
    %9 = arith.cmpi slt, %7, %c0_i32_4 : i32
    %c0_i32_5 = arith.constant 0 : i32
    %10 = arith.cmpi slt, %6, %c0_i32_5 : i32
    %11 = arith.xori %9, %10 : i1
    %12 = arith.andi %11, %8 : i1
    %13 = arith.addi %7, %6 : i32
    %14 = arith.select %12, %13, %7 : i32
    %c0_i32_6 = arith.constant 0 : i32
    %15 = arith.cmpi eq, %14, %c0_i32_6 : i32
    %16 = arith.extui %15 : i1 to i32
    %c0_i32_7 = arith.constant 0 : i32
    %17 = arith.cmpi ne, %16, %c0_i32_7 : i32
    scf.if %17 {
      %c0_i32_19 = arith.constant 0 : i32
      %36 = arith.cmpi eq, %arg1, %c0_i32_19 : i32
      %37 = arith.extui %36 : i1 to i32
      %c0_i32_20 = arith.constant 0 : i32
      %38 = arith.cmpi ne, %37, %c0_i32_20 : i32
      scf.if %38 {
        %c0_46 = arith.constant 0 : index
        %c0_47 = arith.constant 0 : index
        %80 = vector.load %arg13[%c0_46, %c0_47] : memref<32x32xf32, #tpu.memory_space<vmem>>, vector<32x32xf32>
        %c0_48 = arith.constant 0 : index
        %c0_49 = arith.constant 0 : index
        %c0_50 = arith.constant 0 : index
        %81 = vector.load %arg7[%c0_48, %c0_49, %c0_50] : memref<1x32x64xf32, #tpu.memory_space<vmem>>, vector<1x32x64xf32>
        %82 = vector.shape_cast %81 : vector<1x32x64xf32> to vector<32x64xf32>
        %cst_51 = arith.constant dense<0.000000e+00> : vector<32x64xf32>
        %83 = tpu.matmul %80, %82, %cst_51 {dimension_numbers = #tpu.dot_dimension_numbers<[1], [0], [0], [1], [0, 0, 1, 1], [], []>} : vector<32x32xf32>, vector<32x64xf32>, vector<32x64xf32> -> vector<32x64xf32>
        %c0_52 = arith.constant 0 : index
        %c0_53 = arith.constant 0 : index
        %84 = vector.load %arg15[%c0_52, %c0_53] : memref<32x64xf32, #tpu.memory_space<vmem>>, vector<32x64xf32>
        tpu.vector_store %arg15[%c0_52, %c0_53], %83 {strides = array<i32>} : memref<32x64xf32, #tpu.memory_space<vmem>>, vector<32x64xf32>,
      } else {
      }
      %c0 = arith.constant 0 : index
      %c0_21 = arith.constant 0 : index
      %39 = vector.load %arg15[%c0, %c0_21] : memref<32x64xf32, #tpu.memory_space<vmem>>, vector<32x64xf32>
      %c0_22 = arith.constant 0 : index
      %c0_23 = arith.constant 0 : index
      %c0_24 = arith.constant 0 : index
      %40 = vector.load %arg8[%c0_22, %c0_23, %c0_24] : memref<1x1x64xf32, #tpu.memory_space<vmem>>, vector<1x1x64xf32>
      %c0_25 = arith.constant 0 : index
      %c0_26 = arith.constant 0 : index
      %41 = vector.load %arg5[%c0_25, %c0_26] : memref<16x32xbf16, #tpu.memory_space<vmem>>, vector<16x32xbf16>
      %42 = arith.extf %41 : vector<16x32xbf16> to vector<16x32xf32>
      %c0_27 = arith.constant 0 : index
      %c0_28 = arith.constant 0 : index
      %43 = vector.load %arg6[%c0_27, %c0_28] : memref<16x32xbf16, #tpu.memory_space<vmem>>, vector<16x32xbf16>
      %44 = arith.extf %43 : vector<16x32xbf16> to vector<16x32xf32>
      %45 = vector.extract_strided_slice %39 {offsets = [0, 0], sizes = [32, 32], strides = [1, 1]} : vector<32x64xf32> to vector<32x32xf32>
      %cst = arith.constant dense<0.000000e+00> : vector<16x32xf32>
      %46 = tpu.matmul %42, %45, %cst {dimension_numbers = #tpu.dot_dimension_numbers<[1], [0], [0], [1], [0, 0, 1, 1], [], []>} : vector<16x32xf32>, vector<32x32xf32>, vector<16x32xf32> -> vector<16x32xf32>
      %47 = vector.extract_strided_slice %40 {offsets = [0, 0, 0], sizes = [1, 1, 32], strides = [1, 1, 1]} : vector<1x1x64xf32> to vector<1x1x32xf32>
      %48 = vector.shape_cast %47 : vector<1x1x32xf32> to vector<1x32xf32>
      %49 = vector.broadcast %48 : vector<1x32xf32> to vector<16x32xf32>
      %50 = arith.addf %46, %49 : vector<16x32xf32>
      %cst_29 = arith.constant 0.000000e+00 : f32
      %51 = vector.broadcast %cst_29 : f32 to vector<16x32xf32>
      %52 = arith.maximumf %50, %51 : vector<16x32xf32>
      %53 = vector.extract_strided_slice %39 {offsets = [0, 32], sizes = [32, 32], strides = [1, 1]} : vector<32x64xf32> to vector<32x32xf32>
      %cst_30 = arith.constant dense<0.000000e+00> : vector<16x32xf32>
      %54 = tpu.matmul %44, %53, %cst_30 {dimension_numbers = #tpu.dot_dimension_numbers<[1], [0], [0], [1], [0, 0, 1, 1], [], []>} : vector<16x32xf32>, vector<32x32xf32>, vector<16x32xf32> -> vector<16x32xf32>
      %55 = vector.extract_strided_slice %40 {offsets = [0, 0, 32], sizes = [1, 1, 32], strides = [1, 1, 1]} : vector<1x1x64xf32> to vector<1x1x32xf32>
      %56 = vector.shape_cast %55 : vector<1x1x32xf32> to vector<1x32xf32>
      %57 = vector.broadcast %56 : vector<1x32xf32> to vector<16x32xf32>
      %58 = arith.addf %54, %57 : vector<16x32xf32>
      %cst_31 = arith.constant 0.000000e+00 : f32
      %59 = vector.broadcast %cst_31 : f32 to vector<16x32xf32>
      %60 = arith.maximumf %58, %59 : vector<16x32xf32>
      %c0_32 = arith.constant 0 : index
      %c0_33 = arith.constant 0 : index
      %c0_34 = arith.constant 0 : index
      %61 = vector.load %arg9[%c0_32, %c0_33, %c0_34] : memref<1x32x32xf32, #tpu.memory_space<vmem>>, vector<1x32x32xf32>
      %62 = vector.shape_cast %61 : vector<1x32x32xf32> to vector<32x32xf32>
      %cst_35 = arith.constant dense<0.000000e+00> : vector<16x32xf32>
      %63 = tpu.matmul %52, %62, %cst_35 {dimension_numbers = #tpu.dot_dimension_numbers<[1], [0], [0], [1], [0, 0, 1, 1], [], []>} : vector<16x32xf32>, vector<32x32xf32>, vector<16x32xf32> -> vector<16x32xf32>
      %c0_36 = arith.constant 0 : index
      %c0_37 = arith.constant 0 : index
      %c0_38 = arith.constant 0 : index
      %64 = vector.load %arg10[%c0_36, %c0_37, %c0_38] : memref<1x32x32xf32, #tpu.memory_space<vmem>>, vector<1x32x32xf32>
      %65 = vector.shape_cast %64 : vector<1x32x32xf32> to vector<32x32xf32>
      %cst_39 = arith.constant dense<0.000000e+00> : vector<16x32xf32>
      %66 = tpu.matmul %60, %65, %cst_39 {dimension_numbers = #tpu.dot_dimension_numbers<[1], [0], [0], [1], [0, 0, 1, 1], [], []>} : vector<16x32xf32>, vector<32x32xf32>, vector<16x32xf32> -> vector<16x32xf32>
      %67 = arith.addf %63, %66 : vector<16x32xf32>
      %c0_40 = arith.constant 0 : index
      %c0_41 = arith.constant 0 : index
      %c0_42 = arith.constant 0 : index
      %68 = vector.load %arg11[%c0_40, %c0_41, %c0_42] : memref<1x1x32xf32, #tpu.memory_space<vmem>>, vector<1x1x32xf32>
      %69 = vector.shape_cast %68 : vector<1x1x32xf32> to vector<1x32xf32>
      %70 = vector.broadcast %69 : vector<1x32xf32> to vector<16x32xf32>
      %71 = arith.addf %67, %70 : vector<16x32xf32>
      %c1_i32_43 = arith.constant 1 : i32
      %72 = arith.cmpi slt, %arg0, %c1_i32_43 : i32
      %cst_44 = arith.constant 0.000000e+00 : f32
      %73 = vector.broadcast %cst_44 : f32 to vector<16x32xf32>
      %74 = arith.maximumf %71, %73 : vector<16x32xf32>
      %75 = arith.select %72, %74, %71 : vector<16x32xf32>
      %c16_i32 = arith.constant 16 : i32
      %76 = arith.muli %arg1, %c16_i32 : i32
      %77 = tpu.assume_multiple %76, 16 : i32
      %78 = arith.index_cast %77 : i32 to index
      %c0_45 = arith.constant 0 : index
      %79 = vector.load %arg14[%78, %c0_45] : memref<32x32xf32, #tpu.memory_space<vmem>>, vector<16x32xf32>
      tpu.vector_store %arg14[%78, %c0_45], %75 {strides = array<i32>} : memref<32x32xf32, #tpu.memory_space<vmem>>, vector<16x32xf32>,
    } else {
    }
    %c2_i32_8 = arith.constant 2 : i32
    %c0_i32_9 = arith.constant 0 : i32
    %18 = arith.cmpi eq, %c2_i32_8, %c0_i32_9 : i32
    %c1_i32_10 = arith.constant 1 : i32
    %19 = arith.select %18, %c1_i32_10, %c2_i32_8 : i32
    %20 = arith.remsi %arg0, %19 : i32
    %c0_i32_11 = arith.constant 0 : i32
    %21 = arith.cmpi ne, %20, %c0_i32_11 : i32
    %c0_i32_12 = arith.constant 0 : i32
    %22 = arith.cmpi slt, %20, %c0_i32_12 : i32
    %c0_i32_13 = arith.constant 0 : i32
    %23 = arith.cmpi slt, %19, %c0_i32_13 : i32
    %24 = arith.xori %22, %23 : i1
    %25 = arith.andi %24, %21 : i1
    %26 = arith.addi %20, %19 : i32
    %27 = arith.select %25, %26, %20 : i32
    %c1_i32_14 = arith.constant 1 : i32
    %28 = arith.cmpi eq, %27, %c1_i32_14 : i32
    %29 = arith.extui %28 : i1 to i32
    %c0_i32_15 = arith.constant 0 : i32
    %30 = arith.cmpi ne, %29, %c0_i32_15 : i32
    scf.if %30 {
      %c0_i32_19 = arith.constant 0 : i32
      %36 = arith.cmpi eq, %arg1, %c0_i32_19 : i32
      %37 = arith.extui %36 : i1 to i32
      %c0_i32_20 = arith.constant 0 : i32
      %38 = arith.cmpi ne, %37, %c0_i32_20 : i32
      scf.if %38 {
        %c0_46 = arith.constant 0 : index
        %c0_47 = arith.constant 0 : index
        %80 = vector.load %arg14[%c0_46, %c0_47] : memref<32x32xf32, #tpu.memory_space<vmem>>, vector<32x32xf32>
        %c0_48 = arith.constant 0 : index
        %c0_49 = arith.constant 0 : index
        %c0_50 = arith.constant 0 : index
        %81 = vector.load %arg7[%c0_48, %c0_49, %c0_50] : memref<1x32x64xf32, #tpu.memory_space<vmem>>, vector<1x32x64xf32>
        %82 = vector.shape_cast %81 : vector<1x32x64xf32> to vector<32x64xf32>
        %cst_51 = arith.constant dense<0.000000e+00> : vector<32x64xf32>
        %83 = tpu.matmul %80, %82, %cst_51 {dimension_numbers = #tpu.dot_dimension_numbers<[1], [0], [0], [1], [0, 0, 1, 1], [], []>} : vector<32x32xf32>, vector<32x64xf32>, vector<32x64xf32> -> vector<32x64xf32>
        %c0_52 = arith.constant 0 : index
        %c0_53 = arith.constant 0 : index
        %84 = vector.load %arg15[%c0_52, %c0_53] : memref<32x64xf32, #tpu.memory_space<vmem>>, vector<32x64xf32>
        tpu.vector_store %arg15[%c0_52, %c0_53], %83 {strides = array<i32>} : memref<32x64xf32, #tpu.memory_space<vmem>>, vector<32x64xf32>,
      } else {
      }
      %c0 = arith.constant 0 : index
      %c0_21 = arith.constant 0 : index
      %39 = vector.load %arg15[%c0, %c0_21] : memref<32x64xf32, #tpu.memory_space<vmem>>, vector<32x64xf32>
      %c0_22 = arith.constant 0 : index
      %c0_23 = arith.constant 0 : index
      %c0_24 = arith.constant 0 : index
      %40 = vector.load %arg8[%c0_22, %c0_23, %c0_24] : memref<1x1x64xf32, #tpu.memory_space<vmem>>, vector<1x1x64xf32>
      %c0_25 = arith.constant 0 : index
      %c0_26 = arith.constant 0 : index
      %41 = vector.load %arg5[%c0_25, %c0_26] : memref<16x32xbf16, #tpu.memory_space<vmem>>, vector<16x32xbf16>
      %42 = arith.extf %41 : vector<16x32xbf16> to vector<16x32xf32>
      %c0_27 = arith.constant 0 : index
      %c0_28 = arith.constant 0 : index
      %43 = vector.load %arg6[%c0_27, %c0_28] : memref<16x32xbf16, #tpu.memory_space<vmem>>, vector<16x32xbf16>
      %44 = arith.extf %43 : vector<16x32xbf16> to vector<16x32xf32>
      %45 = vector.extract_strided_slice %39 {offsets = [0, 0], sizes = [32, 32], strides = [1, 1]} : vector<32x64xf32> to vector<32x32xf32>
      %cst = arith.constant dense<0.000000e+00> : vector<16x32xf32>
      %46 = tpu.matmul %42, %45, %cst {dimension_numbers = #tpu.dot_dimension_numbers<[1], [0], [0], [1], [0, 0, 1, 1], [], []>} : vector<16x32xf32>, vector<32x32xf32>, vector<16x32xf32> -> vector<16x32xf32>
      %47 = vector.extract_strided_slice %40 {offsets = [0, 0, 0], sizes = [1, 1, 32], strides = [1, 1, 1]} : vector<1x1x64xf32> to vector<1x1x32xf32>
      %48 = vector.shape_cast %47 : vector<1x1x32xf32> to vector<1x32xf32>
      %49 = vector.broadcast %48 : vector<1x32xf32> to vector<16x32xf32>
      %50 = arith.addf %46, %49 : vector<16x32xf32>
      %cst_29 = arith.constant 0.000000e+00 : f32
      %51 = vector.broadcast %cst_29 : f32 to vector<16x32xf32>
      %52 = arith.maximumf %50, %51 : vector<16x32xf32>
      %53 = vector.extract_strided_slice %39 {offsets = [0, 32], sizes = [32, 32], strides = [1, 1]} : vector<32x64xf32> to vector<32x32xf32>
      %cst_30 = arith.constant dense<0.000000e+00> : vector<16x32xf32>
      %54 = tpu.matmul %44, %53, %cst_30 {dimension_numbers = #tpu.dot_dimension_numbers<[1], [0], [0], [1], [0, 0, 1, 1], [], []>} : vector<16x32xf32>, vector<32x32xf32>, vector<16x32xf32> -> vector<16x32xf32>
      %55 = vector.extract_strided_slice %40 {offsets = [0, 0, 32], sizes = [1, 1, 32], strides = [1, 1, 1]} : vector<1x1x64xf32> to vector<1x1x32xf32>
      %56 = vector.shape_cast %55 : vector<1x1x32xf32> to vector<1x32xf32>
      %57 = vector.broadcast %56 : vector<1x32xf32> to vector<16x32xf32>
      %58 = arith.addf %54, %57 : vector<16x32xf32>
      %cst_31 = arith.constant 0.000000e+00 : f32
      %59 = vector.broadcast %cst_31 : f32 to vector<16x32xf32>
      %60 = arith.maximumf %58, %59 : vector<16x32xf32>
      %c0_32 = arith.constant 0 : index
      %c0_33 = arith.constant 0 : index
      %c0_34 = arith.constant 0 : index
      %61 = vector.load %arg9[%c0_32, %c0_33, %c0_34] : memref<1x32x32xf32, #tpu.memory_space<vmem>>, vector<1x32x32xf32>
      %62 = vector.shape_cast %61 : vector<1x32x32xf32> to vector<32x32xf32>
      %cst_35 = arith.constant dense<0.000000e+00> : vector<16x32xf32>
      %63 = tpu.matmul %52, %62, %cst_35 {dimension_numbers = #tpu.dot_dimension_numbers<[1], [0], [0], [1], [0, 0, 1, 1], [], []>} : vector<16x32xf32>, vector<32x32xf32>, vector<16x32xf32> -> vector<16x32xf32>
      %c0_36 = arith.constant 0 : index
      %c0_37 = arith.constant 0 : index
      %c0_38 = arith.constant 0 : index
      %64 = vector.load %arg10[%c0_36, %c0_37, %c0_38] : memref<1x32x32xf32, #tpu.memory_space<vmem>>, vector<1x32x32xf32>
      %65 = vector.shape_cast %64 : vector<1x32x32xf32> to vector<32x32xf32>
      %cst_39 = arith.constant dense<0.000000e+00> : vector<16x32xf32>
      %66 = tpu.matmul %60, %65, %cst_39 {dimension_numbers = #tpu.dot_dimension_numbers<[1], [0], [0], [1], [0, 0, 1, 1], [], []>} : vector<16x32xf32>, vector<32x32xf32>, vector<16x32xf32> -> vector<16x32xf32>
      %67 = arith.addf %63, %66 : vector<16x32xf32>
      %c0_40 = arith.constant 0 : index
      %c0_41 = arith.constant 0 : index
      %c0_42 = arith.constant 0 : index
      %68 = vector.load %arg11[%c0_40, %c0_41, %c0_42] : memref<1x1x32xf32, #tpu.memory_space<vmem>>, vector<1x1x32xf32>
      %69 = vector.shape_cast %68 : vector<1x1x32xf32> to vector<1x32xf32>
      %70 = vector.broadcast %69 : vector<1x32xf32> to vector<16x32xf32>
      %71 = arith.addf %67, %70 : vector<16x32xf32>
      %c1_i32_43 = arith.constant 1 : i32
      %72 = arith.cmpi slt, %arg0, %c1_i32_43 : i32
      %cst_44 = arith.constant 0.000000e+00 : f32
      %73 = vector.broadcast %cst_44 : f32 to vector<16x32xf32>
      %74 = arith.maximumf %71, %73 : vector<16x32xf32>
      %75 = arith.select %72, %74, %71 : vector<16x32xf32>
      %c16_i32 = arith.constant 16 : i32
      %76 = arith.muli %arg1, %c16_i32 : i32
      %77 = tpu.assume_multiple %76, 16 : i32
      %78 = arith.index_cast %77 : i32 to index
      %c0_45 = arith.constant 0 : index
      %79 = vector.load %arg13[%78, %c0_45] : memref<32x32xf32, #tpu.memory_space<vmem>>, vector<16x32xf32>
      tpu.vector_store %arg13[%78, %c0_45], %75 {strides = array<i32>} : memref<32x32xf32, #tpu.memory_space<vmem>>, vector<16x32xf32>,
    } else {
    }
    %c1_i32_16 = arith.constant 1 : i32
    %31 = arith.cmpi eq, %arg0, %c1_i32_16 : i32
    %c1_i32_17 = arith.constant 1 : i32
    %32 = arith.cmpi eq, %arg1, %c1_i32_17 : i32
    %33 = arith.andi %31, %32 : i1
    %34 = arith.extui %33 : i1 to i32
    %c0_i32_18 = arith.constant 0 : i32
    %35 = arith.cmpi ne, %34, %c0_i32_18 : i32
    scf.if %35 {
      %c0 = arith.constant 0 : index
      %c0_19 = arith.constant 0 : index
      %36 = vector.load %arg13[%c0, %c0_19] : memref<32x32xf32, #tpu.memory_space<vmem>>, vector<32x32xf32>
      %37 = tpu.iota {dimensions = array<i32: 0>} : vector<2x32xi32>
      %c0_20 = arith.constant 0 : index
      %c0_21 = arith.constant 0 : index
      %38 = vector.load %arg3[%c0_20, %c0_21] : memref<1x32xi32, #tpu.memory_space<vmem>>, vector<1x32xi32>
      %39 = vector.broadcast %38 : vector<1x32xi32> to vector<2x32xi32>
      %40 = arith.cmpi eq, %39, %37 : vector<2x32xi32>
      %41 = arith.extui %40 : vector<2x32xi1> to vector<2x32xi32>
      %42 = arith.sitofp %41 : vector<2x32xi32> to vector<2x32xf32>
      %cst = arith.constant dense<0.000000e+00> : vector<2x32xf32>
      %43 = tpu.matmul %42, %36, %cst {dimension_numbers = #tpu.dot_dimension_numbers<[1], [0], [0], [1], [0, 0, 1, 1], [], []>} : vector<2x32xf32>, vector<32x32xf32>, vector<2x32xf32> -> vector<2x32xf32>
      %cst_22 = arith.constant dense<0.000000e+00> : vector<2xf32>
      %44 = vector.multi_reduction <add>, %42, %cst_22 [1] : vector<2x32xf32> to vector<2xf32>
      %45 = vector.shape_cast %44 : vector<2xf32> to vector<2x1xf32>
      %46 = vector.broadcast %45 : vector<2x1xf32> to vector<2x32xf32>
      %47 = arith.divf %43, %46 : vector<2x32xf32>
      %48 = tpu.transpose %36, [1, 0] : vector<32x32xf32> -> vector<32x32xf32>
      %49 = vector.shape_cast %40 : vector<2x32xi1> to vector<2x1x32xi1>
      %50 = vector.shape_cast %49 : vector<2x1x32xi1> to vector<2x1x32xi1>
      %51 = vector.broadcast %50 : vector<2x1x32xi1> to vector<2x32x32xi1>
      %52 = vector.shape_cast %48 : vector<32x32xf32> to vector<1x32x32xf32>
      %53 = vector.shape_cast %52 : vector<1x32x32xf32> to vector<1x32x32xf32>
      %54 = vector.broadcast %53 : vector<1x32x32xf32> to vector<2x32x32xf32>
      %cst_23 = arith.constant 0xFF800000 : f32
      %55 = vector.broadcast %cst_23 : f32 to vector<2x32x32xf32>
      %56 = arith.select %51, %54, %55 : vector<2x32x32xi1>, vector<2x32x32xf32>
      %cst_24 = arith.constant dense<0xFF800000> : vector<2x32xf32>
      %57 = vector.multi_reduction <maximumf>, %56, %cst_24 [2] : vector<2x32x32xf32> to vector<2x32xf32>
      %cst_25 = arith.constant 0x7F800000 : f32
      %58 = vector.broadcast %cst_25 : f32 to vector<2x32x32xf32>
      %59 = arith.select %51, %54, %58 : vector<2x32x32xi1>, vector<2x32x32xf32>
      %cst_26 = arith.constant dense<0x7F800000> : vector<2x32xf32>
      %60 = vector.multi_reduction <minimumf>, %59, %cst_26 [2] : vector<2x32x32xf32> to vector<2x32xf32>
      %c0_27 = arith.constant 0 : index
      %c0_28 = arith.constant 0 : index
      %61 = vector.load %arg12[%c0_27, %c0_28] : memref<2x128xf32, #tpu.memory_space<vmem>>, vector<2x32xf32>
      tpu.vector_store %arg12[%c0_27, %c0_28], %43 {strides = array<i32>} : memref<2x128xf32, #tpu.memory_space<vmem>>, vector<2x32xf32>,
      %c0_29 = arith.constant 0 : index
      %c32 = arith.constant 32 : index
      %62 = vector.load %arg12[%c0_29, %c32] : memref<2x128xf32, #tpu.memory_space<vmem>>, vector<2x32xf32>
      tpu.vector_store %arg12[%c0_29, %c32], %47 {strides = array<i32>} : memref<2x128xf32, #tpu.memory_space<vmem>>, vector<2x32xf32>,
      %c0_30 = arith.constant 0 : index
      %c64 = arith.constant 64 : index
      %63 = vector.load %arg12[%c0_30, %c64] : memref<2x128xf32, #tpu.memory_space<vmem>>, vector<2x32xf32>
      tpu.vector_store %arg12[%c0_30, %c64], %57 {strides = array<i32>} : memref<2x128xf32, #tpu.memory_space<vmem>>, vector<2x32xf32>,
      %c0_31 = arith.constant 0 : index
      %c96 = arith.constant 96 : index
      %64 = vector.load %arg12[%c0_31, %c96] : memref<2x128xf32, #tpu.memory_space<vmem>>, vector<2x32xf32>
      tpu.vector_store %arg12[%c0_31, %c96], %60 {strides = array<i32>} : memref<2x128xf32, #tpu.memory_space<vmem>>, vector<2x32xf32>,
    } else {
    }
    return
  }
  func.func @transform_0(%arg0: i32, %arg1: i32) -> (i32, i32) {
    %c0_i32 = arith.constant 0 : i32
    %c0_i32_0 = arith.constant 0 : i32
    %c0_i32_1 = arith.constant 0 : i32
    return %c0_i32, %c0_i32_0 : i32, i32
  }
  func.func @transform_1(%arg0: i32, %arg1: i32) -> (i32, i32) {
    %c0_i32 = arith.constant 0 : i32
    %c0_i32_0 = arith.constant 0 : i32
    %c0_i32_1 = arith.constant 0 : i32
    return %c0_i32, %c0_i32_0 : i32, i32
  }
  func.func @transform_2(%arg0: i32, %arg1: i32) -> (i32, i32) {
    %c0_i32 = arith.constant 0 : i32
    %c0_i32_0 = arith.constant 0 : i32
    %c0_i32_1 = arith.constant 0 : i32
    return %c0_i32, %c0_i32_0 : i32, i32
  }
  func.func @transform_3(%arg0: i32, %arg1: i32) -> (i32, i32) {
    %c0_i32 = arith.constant 0 : i32
    %c0_i32_0 = arith.constant 0 : i32
    return %arg1, %c0_i32 : i32, i32
  }
  func.func @transform_4(%arg0: i32, %arg1: i32) -> (i32, i32) {
    %c0_i32 = arith.constant 0 : i32
    %c0_i32_0 = arith.constant 0 : i32
    return %arg1, %c0_i32 : i32, i32
  }
  func.func @transform_5(%arg0: i32, %arg1: i32) -> (i32, i32, i32) {
    %c0_i32 = arith.constant 0 : i32
    %c0_i32_0 = arith.constant 0 : i32
    %c0_i32_1 = arith.constant 0 : i32
    return %arg0, %c0_i32, %c0_i32_0 : i32, i32, i32
  }
  func.func @transform_6(%arg0: i32, %arg1: i32) -> (i32, i32, i32) {
    %c0_i32 = arith.constant 0 : i32
    %c0_i32_0 = arith.constant 0 : i32
    %c0_i32_1 = arith.constant 0 : i32
    return %arg0, %c0_i32, %c0_i32_0 : i32, i32, i32
  }
  func.func @transform_7(%arg0: i32, %arg1: i32) -> (i32, i32, i32) {
    %c0_i32 = arith.constant 0 : i32
    %c0_i32_0 = arith.constant 0 : i32
    %c0_i32_1 = arith.constant 0 : i32
    return %arg0, %c0_i32, %c0_i32_0 : i32, i32, i32
  }
  func.func @transform_8(%arg0: i32, %arg1: i32) -> (i32, i32, i32) {
    %c0_i32 = arith.constant 0 : i32
    %c0_i32_0 = arith.constant 0 : i32
    %c0_i32_1 = arith.constant 0 : i32
    return %arg0, %c0_i32, %c0_i32_0 : i32, i32, i32
  }
  func.func @transform_9(%arg0: i32, %arg1: i32) -> (i32, i32, i32) {
    %c0_i32 = arith.constant 0 : i32
    %c0_i32_0 = arith.constant 0 : i32
    %c0_i32_1 = arith.constant 0 : i32
    return %arg0, %c0_i32, %c0_i32_0 : i32, i32, i32
  }
  func.func @transform_10(%arg0: i32, %arg1: i32) -> (i32, i32) {
    %c0_i32 = arith.constant 0 : i32
    %c0_i32_0 = arith.constant 0 : i32
    %c0_i32_1 = arith.constant 0 : i32
    return %c0_i32, %c0_i32_0 : i32, i32
  }
}

</mosaic_0001>

<llo_original>
// kernel: hete_gnn_forward.1
$region0: #{hete_gnn_forward.1}
  #allocation0 [shape = 'u32[]', space=smem, size = 0x4, offset = 0x4, fixed_abs, tag = 'smem constant byte address 0x4 - core index']
  #allocation1 [shape = 'u32[144,128]{1,0:T(1,128)}', space=vmem, size = 0x12000, scoped, tag = 'internal scratch']
  #allocation2 [shape = 'f32[32,32]{1,0:T(8,128)}', space=vmem, size = 0x4000, scoped, tag = 'scratch operand']
  #allocation3 [shape = 'f32[32,32]{1,0:T(8,128)}', space=vmem, size = 0x4000, scoped, tag = 'scratch operand']
  #allocation4 [shape = 'f32[32,64]{1,0:T(8,128)}', space=vmem, size = 0x4000, scoped, tag = 'scratch operand']
  %s0 = inlined_call_operand.vmem [shape: f32[32,16], index: 0, kind: input, shape index: {}]
  %s1 = inlined_call_operand.vmem [shape: s32[1,32], index: 1, kind: input, shape index: {}]
  %s2 = inlined_call_operand.vmem [shape: f32[16,32], index: 2, kind: input, shape index: {}]
  %s3 = inlined_call_operand.vmem [shape: bf16[32,32], index: 3, kind: input, shape index: {}]
  %s4 = inlined_call_operand.vmem [shape: bf16[32,32], index: 4, kind: input, shape index: {}]
  %s5 = inlined_call_operand.vmem [shape: f32[2,32,64], index: 5, kind: input, shape index: {}]
  %s6 = inlined_call_operand.vmem [shape: f32[2,1,64], index: 6, kind: input, shape index: {}]
  %s7 = inlined_call_operand.vmem [shape: f32[2,32,32], index: 7, kind: input, shape index: {}]
  %s8 = inlined_call_operand.vmem [shape: f32[2,32,32], index: 8, kind: input, shape index: {}]
  %s9 = inlined_call_operand.vmem [shape: f32[2,1,32], index: 9, kind: input, shape index: {}]
  %s10 = inlined_call_operand.vmem [shape: f32[2,128], index: 10, kind: output, shape index: {}]
  %s11 = sld [smem:[#allocation0]]
  $region97: #{hete_gnn_forward.1} parent=0
    _
  %s13 = ssub.s32 1, %s11
  %s14 = scalar_select 0, %s13, %s11
  loop: start=0, step=1, limit=6
  $region2: #{hete_gnn_forward.1} parent=0 // loop_pre_header
    _
  $region3: #{hete_gnn_forward.1} parent=0 // loop_header
    %s16 = sphi 0, %s20
    %p17 = scmp.ge.s32.totalorder %s16, 6
    %s23 = sphi 0, %s35
    %s24 = sphi 0, %s31
    %s25 = sphi 0, %s23
    %s26 = sphi 0, %s24
    %s27 = sphi 0, %s25
    %s28 = sphi 0, %s26
    %s36 = sphi 0, %s36
    %s38 = sphi 0, %s36
    %s39 = sphi 0, %s38
    %s53 = sphi 0, %s39
    %s57 = sphi 0, %s57
    %s59 = sphi 0, %s57
    %s60 = sphi 0, %s59
    %s74 = sphi 0, %s60
    %s78 = sphi 0, %s78
    %s80 = sphi 0, %s78
    %s81 = sphi 0, %s80
    %s95 = sphi 0, %s81
    %s101 = sphi 0, %s103
    %s104 = sphi 0, %s101
    %s105 = sphi 0, %s104
    %s121 = sphi 0, %s105
    %s127 = sphi 0, %s129
    %s130 = sphi 0, %s127
    %s131 = sphi 0, %s130
    %s147 = sphi 0, %s131
    %s153 = sphi 0, %s155
    %s156 = sphi 0, %s153
    %s157 = sphi 0, %s156
    %s173 = sphi 0, %s157
    %s179 = sphi 0, %s181
    %s182 = sphi 0, %s179
    %s183 = sphi 0, %s182
    %s199 = sphi 0, %s183
    %s205 = sphi 0, %s207
    %s208 = sphi 0, %s205
    %s209 = sphi 0, %s208
    %s225 = sphi 0, %s209
    %s231 = sphi 0, %s233
    %s234 = sphi 0, %s231
    %s235 = sphi 0, %s234
    %s251 = sphi 0, %s235
    %s257 = sphi 0, %s259
    %s260 = sphi 0, %s257
    %s261 = sphi 0, %s260
    %s277 = sphi 0, %s261
    %s281 = sphi 0, %s281
    %s283 = sphi 0, %s281
    %s284 = sphi 0, %s283
    %s298 = sphi 0, %s284
  $region4: #{hete_gnn_forward.1} parent=0 // loop_header_branch
    %19 = sbr.rel (%p17) target = $region8
  $region5: #{hete_gnn_forward.1} parent=0 // loop_body
    %s21 = ssub.s32 %s16, 1
    %s22 = ssub.s32 %s16, 2
    %s29 = sadd.s32 1, %s24
    %p30 = scmp.ge.s32.totalorder %s29, 2
    %s31 = scalar_select %p30, 0, %s29
    %s32 = sadd.s32 1, %s23
    %s33 = scalar_select %p30, %s32, %s23
    %p34 = scmp.ge.s32.totalorder %s33, 2
    %s35 = scalar_select %p34, 0, %s33
    %s37 = sadd.s32 %s36, 1
    %p40 = scmp.eq.s32.totalorder %s16, 3
    %p41 = scmp.ne.s32.totalorder %s36, %s38
    %p42 = scmp.eq.s32.totalorder %s16, 0
    %p43 = por %p41, %p42
    %p44 = scmp.ne.s32.totalorder %s36, %s38
    %p45 = scmp.eq.s32.totalorder %s21, 3
    %p46 = por %p44, %p45
    %p47 = scmp.ne.s32.totalorder %s38, %s39
    %p48 = scmp.eq.s32.totalorder %s21, 0
    %p49 = por %p47, %p48
    %p50 = scmp.ne.s32.totalorder %s38, %s39
    %p51 = scmp.eq.s32.totalorder %s22, 3
    %p52 = por %p50, %p51
    %p54 = scmp.ne.s32.totalorder %s39, %s53
    %p55 = scmp.eq.s32.totalorder %s22, 0
    %p56 = por %p54, %p55
    %s58 = sadd.s32 %s57, 1
    %p61 = scmp.eq.s32.totalorder %s16, 3
    %p62 = scmp.ne.s32.totalorder %s57, %s59
    %p63 = scmp.eq.s32.totalorder %s16, 0
    %p64 = por %p62, %p63
    %p65 = scmp.ne.s32.totalorder %s57, %s59
    %p66 = scmp.eq.s32.totalorder %s21, 3
    %p67 = por %p65, %p66
    %p68 = scmp.ne.s32.totalorder %s59, %s60
    %p69 = scmp.eq.s32.totalorder %s21, 0
    %p70 = por %p68, %p69
    %p71 = scmp.ne.s32.totalorder %s59, %s60
    %p72 = scmp.eq.s32.totalorder %s22, 3
    %p73 = por %p71, %p72
    %p75 = scmp.ne.s32.totalorder %s60, %s74
    %p76 = scmp.eq.s32.totalorder %s22, 0
    %p77 = por %p75, %p76
    %s79 = sadd.s32 %s78, 1
    %p82 = scmp.eq.s32.totalorder %s16, 3
    %p83 = scmp.ne.s32.totalorder %s78, %s80
    %p84 = scmp.eq.s32.totalorder %s16, 0
    %p85 = por %p83, %p84
    %p86 = scmp.ne.s32.totalorder %s78, %s80
    %p87 = scmp.eq.s32.totalorder %s21, 3
    %p88 = por %p86, %p87
    %p89 = scmp.ne.s32.totalorder %s80, %s81
    %p90 = scmp.eq.s32.totalorder %s21, 0
    %p91 = por %p89, %p90
    %p92 = scmp.ne.s32.totalorder %s80, %s81
    %p93 = scmp.eq.s32.totalorder %s22, 3
    %p94 = por %p92, %p93
    %p96 = scmp.ne.s32.totalorder %s81, %s95
    %p97 = scmp.eq.s32.totalorder %s22, 0
    %p98 = por %p96, %p97
    %s99 = ssub.s32 %s24, %s31
    %p100 = scmp.eq.s32.totalorder %s99, 0
    %s102 = sadd.s32 %s101, 1
    %s103 = scalar_select %p100, %s101, %s102
    %p106 = pneg %p100
    %p107 = scmp.eq.s32.totalorder %s16, 3
    %p108 = por %p106, %p107
    %p109 = scmp.ne.s32.totalorder %s101, %s104
    %p110 = scmp.eq.s32.totalorder %s16, 0
    %p111 = por %p109, %p110
    %p112 = scmp.ne.s32.totalorder %s101, %s104
    %p113 = scmp.eq.s32.totalorder %s21, 3
    %p114 = por %p112, %p113
    %p115 = scmp.ne.s32.totalorder %s104, %s105
    %p116 = scmp.eq.s32.totalorder %s21, 0
    %p117 = por %p115, %p116
    %p118 = scmp.ne.s32.totalorder %s104, %s105
    %p119 = scmp.eq.s32.totalorder %s22, 3
    %p120 = por %p118, %p119
    %p122 = scmp.ne.s32.totalorder %s105, %s121
    %p123 = scmp.eq.s32.totalorder %s22, 0
    %p124 = por %p122, %p123
    %s125 = ssub.s32 %s24, %s31
    %p126 = scmp.eq.s32.totalorder %s125, 0
    %s128 = sadd.s32 %s127, 1
    %s129 = scalar_select %p126, %s127, %s128
    %p132 = pneg %p126
    %p133 = scmp.eq.s32.totalorder %s16, 3
    %p134 = por %p132, %p133
    %p135 = scmp.ne.s32.totalorder %s127, %s130
    %p136 = scmp.eq.s32.totalorder %s16, 0
    %p137 = por %p135, %p136
    %p138 = scmp.ne.s32.totalorder %s127, %s130
    %p139 = scmp.eq.s32.totalorder %s21, 3
    %p140 = por %p138, %p139
    %p141 = scmp.ne.s32.totalorder %s130, %s131
    %p142 = scmp.eq.s32.totalorder %s21, 0
    %p143 = por %p141, %p142
    %p144 = scmp.ne.s32.totalorder %s130, %s131
    %p145 = scmp.eq.s32.totalorder %s22, 3
    %p146 = por %p144, %p145
    %p148 = scmp.ne.s32.totalorder %s131, %s147
    %p149 = scmp.eq.s32.totalorder %s22, 0
    %p150 = por %p148, %p149
    %s151 = ssub.s32 %s23, %s35
    %p152 = scmp.eq.s32.totalorder %s151, 0
    %s154 = sadd.s32 %s153, 1
    %s155 = scalar_select %p152, %s153, %s154
    %p158 = pneg %p152
    %p159 = scmp.eq.s32.totalorder %s16, 3
    %p160 = por %p158, %p159
    %p161 = scmp.ne.s32.totalorder %s153, %s156
    %p162 = scmp.eq.s32.totalorder %s16, 0
    %p163 = por %p161, %p162
    %p164 = scmp.ne.s32.totalorder %s153, %s156
    %p165 = scmp.eq.s32.totalorder %s21, 3
    %p166 = por %p164, %p165
    %p167 = scmp.ne.s32.totalorder %s156, %s157
    %p168 = scmp.eq.s32.totalorder %s21, 0
    %p169 = por %p167, %p168
    %p170 = scmp.ne.s32.totalorder %s156, %s157
    %p171 = scmp.eq.s32.totalorder %s22, 3
    %p172 = por %p170, %p171
    %p174 = scmp.ne.s32.totalorder %s157, %s173
    %p175 = scmp.eq.s32.totalorder %s22, 0
    %p176 = por %p174, %p175
    %s177 = ssub.s32 %s23, %s35
    %p178 = scmp.eq.s32.totalorder %s177, 0
    %s180 = sadd.s32 %s179, 1
    %s181 = scalar_select %p178, %s179, %s180
    %p184 = pneg %p178
    %p185 = scmp.eq.s32.totalorder %s16, 3
    %p186 = por %p184, %p185
    %p187 = scmp.ne.s32.totalorder %s179, %s182
    %p188 = scmp.eq.s32.totalorder %s16, 0
    %p189 = por %p187, %p188
    %p190 = scmp.ne.s32.totalorder %s179, %s182
    %p191 = scmp.eq.s32.totalorder %s21, 3
    %p192 = por %p190, %p191
    %p193 = scmp.ne.s32.totalorder %s182, %s183
    %p194 = scmp.eq.s32.totalorder %s21, 0
    %p195 = por %p193, %p194
    %p196 = scmp.ne.s32.totalorder %s182, %s183
    %p197 = scmp.eq.s32.totalorder %s22, 3
    %p198 = por %p196, %p197
    %p200 = scmp.ne.s32.totalorder %s183, %s199
    %p201 = scmp.eq.s32.totalorder %s22, 0
    %p202 = por %p200, %p201
    %s203 = ssub.s32 %s23, %s35
    %p204 = scmp.eq.s32.totalorder %s203, 0
    %s206 = sadd.s32 %s205, 1
    %s207 = scalar_select %p204, %s205, %s206
    %p210 = pneg %p204
    %p211 = scmp.eq.s32.totalorder %s16, 3
    %p212 = por %p210, %p211
    %p213 = scmp.ne.s32.totalorder %s205, %s208
    %p214 = scmp.eq.s32.totalorder %s16, 0
    %p215 = por %p213, %p214
    %p216 = scmp.ne.s32.totalorder %s205, %s208
    %p217 = scmp.eq.s32.totalorder %s21, 3
    %p218 = por %p216, %p217
    %p219 = scmp.ne.s32.totalorder %s208, %s209
    %p220 = scmp.eq.s32.totalorder %s21, 0
    %p221 = por %p219, %p220
    %p222 = scmp.ne.s32.totalorder %s208, %s209
    %p223 = scmp.eq.s32.totalorder %s22, 3
    %p224 = por %p222, %p223
    %p226 = scmp.ne.s32.totalorder %s209, %s225
    %p227 = scmp.eq.s32.totalorder %s22, 0
    %p228 = por %p226, %p227
    %s229 = ssub.s32 %s23, %s35
    %p230 = scmp.eq.s32.totalorder %s229, 0
    %s232 = sadd.s32 %s231, 1
    %s233 = scalar_select %p230, %s231, %s232
    %p236 = pneg %p230
    %p237 = scmp.eq.s32.totalorder %s16, 3
    %p238 = por %p236, %p237
    %p239 = scmp.ne.s32.totalorder %s231, %s234
    %p240 = scmp.eq.s32.totalorder %s16, 0
    %p241 = por %p239, %p240
    %p242 = scmp.ne.s32.totalorder %s231, %s234
    %p243 = scmp.eq.s32.totalorder %s21, 3
    %p244 = por %p242, %p243
    %p245 = scmp.ne.s32.totalorder %s234, %s235
    %p246 = scmp.eq.s32.totalorder %s21, 0
    %p247 = por %p245, %p246
    %p248 = scmp.ne.s32.totalorder %s234, %s235
    %p249 = scmp.eq.s32.totalorder %s22, 3
    %p250 = por %p248, %p249
    %p252 = scmp.ne.s32.totalorder %s235, %s251
    %p253 = scmp.eq.s32.totalorder %s22, 0
    %p254 = por %p252, %p253
    %s255 = ssub.s32 %s23, %s35
    %p256 = scmp.eq.s32.totalorder %s255, 0
    %s258 = sadd.s32 %s257, 1
    %s259 = scalar_select %p256, %s257, %s258
    %p262 = pneg %p256
    %p263 = scmp.eq.s32.totalorder %s16, 3
    %p264 = por %p262, %p263
    %p265 = scmp.ne.s32.totalorder %s257, %s260
    %p266 = scmp.eq.s32.totalorder %s16, 0
    %p267 = por %p265, %p266
    %p268 = scmp.ne.s32.totalorder %s257, %s260
    %p269 = scmp.eq.s32.totalorder %s21, 3
    %p270 = por %p268, %p269
    %p271 = scmp.ne.s32.totalorder %s260, %s261
    %p272 = scmp.eq.s32.totalorder %s21, 0
    %p273 = por %p271, %p272
    %p274 = scmp.ne.s32.totalorder %s260, %s261
    %p275 = scmp.eq.s32.totalorder %s22, 3
    %p276 = por %p274, %p275
    %p278 = scmp.ne.s32.totalorder %s261, %s277
    %p279 = scmp.eq.s32.totalorder %s22, 0
    %p280 = por %p278, %p279
    %s282 = sadd.s32 %s281, 1
    %p285 = scmp.eq.s32.totalorder %s16, 3
    %p286 = scmp.ne.s32.totalorder %s281, %s283
    %p287 = scmp.eq.s32.totalorder %s16, 0
    %p288 = por %p286, %p287
    %p289 = scmp.ne.s32.totalorder %s281, %s283
    %p290 = scmp.eq.s32.totalorder %s21, 3
    %p291 = por %p289, %p290
    %p292 = scmp.ne.s32.totalorder %s283, %s284
    %p293 = scmp.eq.s32.totalorder %s21, 0
    %p294 = por %p292, %p293
    %p295 = scmp.ne.s32.totalorder %s283, %s284
    %p296 = scmp.eq.s32.totalorder %s22, 3
    %p297 = por %p295, %p296
    %p299 = scmp.ne.s32.totalorder %s284, %s298
    %p300 = scmp.eq.s32.totalorder %s22, 0
    %p301 = por %p299, %p300
    %p302 = scmp.le.s32.totalorder 1, %s16
    %p303 = scmp.lt.s32.totalorder %s16, 5
    %p304 = pnand %p302, %p303
    %p305 = pneg %p304
    // Predicated region
    $region9: #{hete_gnn_forward.1} parent=5 // pred_check
      _
    $region10: #{hete_gnn_forward.1} parent=5 // pred_check_branch
      %307 = sbr.rel (%p304) target = $region12
    $region11: #{hete_gnn_forward.1} parent=5 // pred_region
      %s308 = ssub.s32 %s16, 1
      // Predicated region
      $region13: #{hete_gnn_forward.1} parent=11 // pred_check
        %p309 = pneg %p49
      $region14: #{hete_gnn_forward.1} parent=11 // pred_check_branch
        %311 = sbr.rel (%p309) target = $region16
      $region15: #{hete_gnn_forward.1} parent=11 // pred_region
        _
      $region16: #{hete_gnn_forward.1} parent=11 // pred_fallthru
        _
      // Predicated region
      $region17: #{hete_gnn_forward.1} parent=11 // pred_check
        %p312 = pneg %p70
      $region18: #{hete_gnn_forward.1} parent=11 // pred_check_branch
        %314 = sbr.rel (%p312) target = $region20
      $region19: #{hete_gnn_forward.1} parent=11 // pred_region
        _
      $region20: #{hete_gnn_forward.1} parent=11 // pred_fallthru
        _
      // Predicated region
      $region21: #{hete_gnn_forward.1} parent=11 // pred_check
        %p315 = pneg %p91
      $region22: #{hete_gnn_forward.1} parent=11 // pred_check_branch
        %317 = sbr.rel (%p315) target = $region24
      $region23: #{hete_gnn_forward.1} parent=11 // pred_region
        _
      $region24: #{hete_gnn_forward.1} parent=11 // pred_fallthru
        _
    $region12: #{hete_gnn_forward.1} parent=5 // pred_fallthru
      _
    %p318 = scmp.lt.s32.totalorder %s16, 4
    // Predicated region
    $region25: #{hete_gnn_forward.1} parent=5 // pred_check
      %p319 = pneg %p318
    $region26: #{hete_gnn_forward.1} parent=5 // pred_check_branch
      %321 = sbr.rel (%p319) target = $region28
    $region27: #{hete_gnn_forward.1} parent=5 // pred_region
      // Predicated region
      $region29: #{hete_gnn_forward.1} parent=27 // pred_check
        %p322 = pneg %p111
      $region30: #{hete_gnn_forward.1} parent=27 // pred_check_branch
        %324 = sbr.rel (%p322) target = $region32
      $region31: #{hete_gnn_forward.1} parent=27 // pred_region
        %s325 = smul.u32 2, %s24
        %p326 = scmp.lt.s32.totalorder %s325, 3
        %s327 = scalar_select %p326, %s325, 3
        %s328 = smul.addr %s327, 4
        %s329 = scalar_lea.vmem %s3, %s328
        %s330 = smul.u32 2, %s24
      $region32: #{hete_gnn_forward.1} parent=27 // pred_fallthru
        _
      // Predicated region
      $region33: #{hete_gnn_forward.1} parent=27 // pred_check
        %p331 = pneg %p137
      $region34: #{hete_gnn_forward.1} parent=27 // pred_check_branch
        %333 = sbr.rel (%p331) target = $region36
      $region35: #{hete_gnn_forward.1} parent=27 // pred_region
        %s334 = smul.u32 2, %s24
        %p335 = scmp.lt.s32.totalorder %s334, 3
        %s336 = scalar_select %p335, %s334, 3
        %s337 = smul.addr %s336, 4
        %s338 = scalar_lea.vmem %s4, %s337
        %s339 = smul.u32 2, %s24
      $region36: #{hete_gnn_forward.1} parent=27 // pred_fallthru
        _
      // Predicated region
      $region37: #{hete_gnn_forward.1} parent=27 // pred_check
        %p340 = pneg %p163
      $region38: #{hete_gnn_forward.1} parent=27 // pred_check_branch
        %342 = sbr.rel (%p340) target = $region40
      $region39: #{hete_gnn_forward.1} parent=27 // pred_region
        %p343 = scmp.lt.s32.totalorder %s23, 1
        %s344 = scalar_select %p343, %s23, 1
        %s345 = smul.addr %s344, 4
        %s346 = smul.addr %s345, 8
        %s347 = scalar_lea.vmem %s5, %s346
      $region40: #{hete_gnn_forward.1} parent=27 // pred_fallthru
        _
      // Predicated region
      $region41: #{hete_gnn_forward.1} parent=27 // pred_check
        %p348 = pneg %p189
      $region42: #{hete_gnn_forward.1} parent=27 // pred_check_branch
        %350 = sbr.rel (%p348) target = $region44
      $region43: #{hete_gnn_forward.1} parent=27 // pred_region
        %p351 = scmp.lt.s32.totalorder %s23, 1
        %s352 = scalar_select %p351, %s23, 1
        %s353 = scalar_lea.vmem %s6, %s352
      $region44: #{hete_gnn_forward.1} parent=27 // pred_fallthru
        _
      // Predicated region
      $region45: #{hete_gnn_forward.1} parent=27 // pred_check
        %p354 = pneg %p215
      $region46: #{hete_gnn_forward.1} parent=27 // pred_check_branch
        %356 = sbr.rel (%p354) target = $region48
      $region47: #{hete_gnn_forward.1} parent=27 // pred_region
        %p357 = scmp.lt.s32.totalorder %s23, 1
        %s358 = scalar_select %p357, %s23, 1
        %s359 = smul.addr %s358, 4
        %s360 = smul.addr %s359, 8
        %s361 = scalar_lea.vmem %s7, %s360
      $region48: #{hete_gnn_forward.1} parent=27 // pred_fallthru
        _
      // Predicated region
      $region49: #{hete_gnn_forward.1} parent=27 // pred_check
        %p362 = pneg %p241
      $region50: #{hete_gnn_forward.1} parent=27 // pred_check_branch
        %364 = sbr.rel (%p362) target = $region52
      $region51: #{hete_gnn_forward.1} parent=27 // pred_region
        %p365 = scmp.lt.s32.totalorder %s23, 1
        %s366 = scalar_select %p365, %s23, 1
        %s367 = smul.addr %s366, 4
        %s368 = smul.addr %s367, 8
        %s369 = scalar_lea.vmem %s8, %s368
      $region52: #{hete_gnn_forward.1} parent=27 // pred_fallthru
        _
      // Predicated region
      $region53: #{hete_gnn_forward.1} parent=27 // pred_check
        %p370 = pneg %p267
      $region54: #{hete_gnn_forward.1} parent=27 // pred_check_branch
        %372 = sbr.rel (%p370) target = $region56
      $region55: #{hete_gnn_forward.1} parent=27 // pred_region
        %p373 = scmp.lt.s32.totalorder %s23, 1
        %s374 = scalar_select %p373, %s23, 1
        %s375 = scalar_lea.vmem %s9, %s374
      $region56: #{hete_gnn_forward.1} parent=27 // pred_fallthru
        _
    $region28: #{hete_gnn_forward.1} parent=5 // pred_fallthru
      _
    %p376 = scmp.le.s32.totalorder 1, %s16
    %p377 = scmp.lt.s32.totalorder %s16, 5
    %p378 = pnand %p376, %p377
    %p379 = pneg %p378
    // Predicated region
    $region57: #{hete_gnn_forward.1} parent=5 // pred_check
      _
    $region58: #{hete_gnn_forward.1} parent=5 // pred_check_branch
      %381 = sbr.rel (%p378) target = $region60
    $region59: #{hete_gnn_forward.1} parent=5 // pred_region
      %s382 = ssub.s32 %s16, 1
      %p383 = pneg %p49
      %p384 = pneg %p46
      %p385 = pneg %p70
      %p386 = pneg %p67
      %p387 = pneg %p91
      %p388 = pneg %p88
      %s389 = smul.u32 2, %s26
      %p390 = scmp.lt.s32.totalorder %s389, 3
      %s391 = scalar_select %p390, %s389, 3
      %s392 = smul.addr %s391, 4
      %s393 = scalar_lea.vmem %s3, %s392
      %p394 = pneg %p117
      %p395 = pneg %p114
      %s396 = smul.u32 2, %s26
      %p397 = scmp.lt.s32.totalorder %s396, 3
      %s398 = scalar_select %p397, %s396, 3
      %s399 = smul.addr %s398, 4
      %s400 = scalar_lea.vmem %s4, %s399
      %p401 = pneg %p143
      %p402 = pneg %p140
      %p403 = scmp.lt.s32.totalorder %s25, 1
      %s404 = scalar_select %p403, %s25, 1
      %s405 = smul.addr %s404, 4
      %s406 = smul.addr %s405, 8
      %s407 = scalar_lea.vmem %s5, %s406
      %p408 = pneg %p169
      %p409 = pneg %p166
      %p410 = scmp.lt.s32.totalorder %s25, 1
      %s411 = scalar_select %p410, %s25, 1
      %s412 = scalar_lea.vmem %s6, %s411
      %p413 = pneg %p195
      %p414 = pneg %p192
      %p415 = scmp.lt.s32.totalorder %s25, 1
      %s416 = scalar_select %p415, %s25, 1
      %s417 = smul.addr %s416, 4
      %s418 = smul.addr %s417, 8
      %s419 = scalar_lea.vmem %s7, %s418
      %p420 = pneg %p221
      %p421 = pneg %p218
      %p422 = scmp.lt.s32.totalorder %s25, 1
      %s423 = scalar_select %p422, %s25, 1
      %s424 = smul.addr %s423, 4
      %s425 = smul.addr %s424, 8
      %s426 = scalar_lea.vmem %s8, %s425
      %p427 = pneg %p247
      %p428 = pneg %p244
      %p429 = scmp.lt.s32.totalorder %s25, 1
      %s430 = scalar_select %p429, %s25, 1
      %s431 = scalar_lea.vmem %s9, %s430
      %p432 = pneg %p273
      %p433 = pneg %p270
      %p434 = pneg %p294
      %p435 = pneg %p291
      %s436 = smul.u32 2, %s26
      %p437 = scmp.lt.s32.totalorder %s436, 3
      %s438 = scalar_select %p437, %s436, 3
      %s439 = smul.addr %s438, 4
      %s440 = scalar_lea.vmem %s3, %s439
      %s441 = smul.u32 2, %s26
      %s442 = smul.u32 2, %s26
      %p443 = scmp.lt.s32.totalorder %s442, 3
      %s444 = scalar_select %p443, %s442, 3
      %s445 = smul.addr %s444, 4
      %s446 = scalar_lea.vmem %s4, %s445
      %s447 = smul.u32 2, %s26
      %p448 = scmp.lt.s32.totalorder %s25, 1
      %s449 = scalar_select %p448, %s25, 1
      %s450 = smul.addr %s449, 4
      %s451 = smul.addr %s450, 8
      %s452 = scalar_lea.vmem %s5, %s451
      %p453 = scmp.lt.s32.totalorder %s25, 1
      %s454 = scalar_select %p453, %s25, 1
      %s455 = scalar_lea.vmem %s6, %s454
      %p456 = scmp.lt.s32.totalorder %s25, 1
      %s457 = scalar_select %p456, %s25, 1
      %s458 = smul.addr %s457, 4
      %s459 = smul.addr %s458, 8
      %s460 = scalar_lea.vmem %s7, %s459
      %p461 = scmp.lt.s32.totalorder %s25, 1
      %s462 = scalar_select %p461, %s25, 1
      %s463 = smul.addr %s462, 4
      %s464 = smul.addr %s463, 8
      %s465 = scalar_lea.vmem %s8, %s464
      %p466 = scmp.lt.s32.totalorder %s25, 1
      %s467 = scalar_select %p466, %s25, 1
      %s468 = scalar_lea.vmem %s9, %s467
      %p469 = scmp.eq.s32.totalorder %s25, 0
      %p470 = scmp.eq.s32.totalorder %s26, 0
      %p471 = pnand %p469, %p470
      %p472 = pneg %p471
      // Predicated region
      $region61: #{hete_gnn_forward.1} parent=59 // pred_check
        _
      $region62: #{hete_gnn_forward.1} parent=59 // pred_check_branch
        %474 = sbr.rel (%p471) target = $region64
      $region63: #{hete_gnn_forward.1} parent=59 // pred_region
        %v475 = vld [vmem:[%s0] sm:$0xff]
        %v476 = vld [vmem:[%s0 + $0x8] sm:$0xff]
        %v477 = vld [vmem:[%s0 + $0x10] sm:$0xff]
        %v478 = vld [vmem:[%s0 + $0x18] sm:$0xff]
        %v479 = vld [vmem:[%s2] sm:$0xff]
        %v480 = vld [vmem:[%s2 + $0x8] sm:$0xff]
        %vm481 = vcmask 130048
        %v483 = vsel %vm481, %v475, 0
        %v486 = vsel %vm481, %v476, 0
        %v489 = vsel %vm481, %v477, 0
        %v492 = vsel %vm481, %v478, 0
        %494 = vmatprep.subr.mxu0 0.0
        %495 = vmatpush1.msra.mxu0 %v479
        %496 = vmatprep.subr.mxu0 0.0
        %497 = vmatpush1.msra.mxu0 %v480
        %498 = vmatprep.subr.mxu0 0.0
        %499 = vmatpush1.msra.mxu0 0.0
        %500 = vmatprep.subr.mxu0 0.0
        %501 = vmatpush1.msra.mxu0 0.0
        %502 = vmatprep.subr.mxu0 0.0
        %503 = vmatpush1.msra.mxu0 0.0
        %504 = vmatprep.subr.mxu0 0.0
        %505 = vmatpush1.msra.mxu0 0.0
        %506 = vmatprep.subr.mxu0 0.0
        %507 = vmatpush1.msra.mxu0 0.0
        %508 = vmatprep.subr.mxu0 0.0
        %509 = vmatpush1.msra.mxu0 0.0
        %510 = vmatprep.subr.mxu0 0.0
        %511 = vmatpush1.msra.mxu0 0.0
        %512 = vmatprep.subr.mxu0 0.0
        %513 = vmatpush1.msra.mxu0 0.0
        %514 = vmatprep.subr.mxu0 0.0
        %515 = vmatpush1.msra.mxu0 0.0
        %516 = vmatprep.subr.mxu0 0.0
        %517 = vmatpush1.msra.mxu0 0.0
        %518 = vmatprep.subr.mxu0 0.0
        %519 = vmatpush1.msra.mxu0 0.0
        %520 = vmatprep.subr.mxu0 0.0
        %521 = vmatpush1.msra.mxu0 0.0
        %522 = vmatprep.subr.mxu0 0.0
        %523 = vmatpush1.msra.mxu0 0.0
        %524 = vmatprep.subr.mxu0 0.0
        %525 = vmatpush1.msra.mxu0 0.0
        %526 = vmatprep.subr.mxu0 0.0
        %527 = vmatpush1.msra.mxu0 0.0
        %528 = vmatprep.subr.mxu0 0.0
        %529 = vmatpush1.msra.mxu0 0.0
        %530 = vmatprep.subr.mxu0 0.0
        %531 = vmatpush1.msra.mxu0 0.0
        %532 = vmatprep.subr.mxu0 0.0
        %533 = vmatpush1.msra.mxu0 0.0
        %534 = vmatprep.subr.mxu0 0.0
        %535 = vmatpush1.msra.mxu0 0.0
        %536 = vmatprep.subr.mxu0 0.0
        %537 = vmatpush1.msra.mxu0 0.0
        %538 = vmatprep.subr.mxu0 0.0
        %539 = vmatpush1.msra.mxu0 0.0
        %540 = vmatprep.subr.mxu0 0.0
        %541 = vmatpush1.msra.mxu0 0.0
        %542 = vmatprep.subr.mxu0 0.0
        %543 = vmatpush1.msra.mxu0 0.0
        %544 = vmatprep.subr.mxu0 0.0
        %545 = vmatpush1.msra.mxu0 0.0
        %546 = vmatprep.subr.mxu0 0.0
        %547 = vmatpush1.msra.mxu0 0.0
        %548 = vmatprep.subr.mxu0 0.0
        %549 = vmatpush1.msra.mxu0 0.0
        %550 = vmatprep.subr.mxu0 0.0
        %551 = vmatpush1.msra.mxu0 0.0
        %552 = vmatprep.subr.mxu0 0.0
        %553 = vmatpush1.msra.mxu0 0.0
        %554 = vmatprep.subr.mxu0 0.0
        %555 = vmatpush1.msra.mxu0 0.0
        %556 = vmatprep.subr.mxu0 0.0
        %557 = vmatpush1.msra.mxu0 0.0
        %558 = vmatprep.mubr.f32.mxu0 0.0
        %559 = vmatmul.mubr.f32.gmra.mrb[0].mxu0 %v483
        %v560 = vpop.f32.mrb[0].mxu0
        %v561 = vadd.f32 0.0, %v560
        %v562 = vpop.f32.mrb[0].mxu0
        %563 = vmatprep.mubr.f32.mxu0 0.0
        %564 = vmatmul.mubr.f32.gmra.mrb[0].mxu0 %v486
        %v565 = vpop.f32.mrb[0].mxu0
        %v566 = vadd.f32 0.0, %v565
        %v567 = vpop.f32.mrb[0].mxu0
        %568 = vmatprep.mubr.f32.mxu0 0.0
        %569 = vmatmul.mubr.f32.gmra.mrb[0].mxu0 %v489
        %v570 = vpop.f32.mrb[0].mxu0
        %v571 = vadd.f32 0.0, %v570
        %v572 = vpop.f32.mrb[0].mxu0
        %573 = vmatprep.mubr.f32.mxu0 0.0
        %574 = vmatmul.mubr.f32.gmra.mrb[0].mxu0 %v492
        %v575 = vpop.f32.mrb[0].mxu0
        %v576 = vadd.f32 0.0, %v575
        %v577 = vpop.f32.mrb[0].mxu0
        %578 = vdwg.mxu0
        %vm579 = vcmask 261120
        %580 = vst.msk [vmem:[#allocation2] sm:$0xff] %vm579, %v561
        %581 = vst.msk [vmem:[#allocation2 + $0x8] sm:$0xff] %vm579, %v566
        %582 = vst.msk [vmem:[#allocation2 + $0x10] sm:$0xff] %vm579, %v571
        %583 = vst.msk [vmem:[#allocation2 + $0x18] sm:$0xff] %vm579, %v576
      $region64: #{hete_gnn_forward.1} parent=59 // pred_fallthru
        _
      %p584 = scmp.lt.s32.totalorder %s25, 0
      %s585 = ssub.s32 0, %s25
      %s586 = scalar_select %p584, %s585, %s25
      %s587 = sand.u32 %s586, 1
      %s588 = ssub.s32 0, %s587
      %s589 = scalar_select %p584, %s588, %s587
      %p590 = scmp.ne.s32.totalorder %s589, 0
      %p591 = scmp.lt.s32.totalorder %s589, 0
      %p592 = pnand %p591, %p590
      %p593 = pneg %p592
      %s594 = sadd.s32 %s589, 2
      %s595 = scalar_select %p593, %s594, %s589
      %p596 = scmp.eq.s32.totalorder %s595, 0
      // Predicated region
      $region65: #{hete_gnn_forward.1} parent=59 // pred_check
        %p597 = pneg %p596
      $region66: #{hete_gnn_forward.1} parent=59 // pred_check_branch
        %599 = sbr.rel (%p597) target = $region68
      $region67: #{hete_gnn_forward.1} parent=59 // pred_region
        // Predicated region
        $region69: #{hete_gnn_forward.1} parent=67 // pred_check
          %p600 = pneg %p470
        $region70: #{hete_gnn_forward.1} parent=67 // pred_check_branch
          %602 = sbr.rel (%p600) target = $region72
        $region71: #{hete_gnn_forward.1} parent=67 // pred_region
          %v603 = vld [vmem:[#allocation2] sm:$0xff]
          %v604 = vld [vmem:[#allocation2 + $0x8] sm:$0xff]
          %v605 = vld [vmem:[#allocation2 + $0x10] sm:$0xff]
          %v606 = vld [vmem:[#allocation2 + $0x18] sm:$0xff]
          %v607 = vld [vmem:[%s452] sm:$0xff]
          %v608 = vld [vmem:[%s452 + $0x8] sm:$0xff]
          %v609 = vld [vmem:[%s452 + $0x10] sm:$0xff]
          %v610 = vld [vmem:[%s452 + $0x18] sm:$0xff]
          %vm611 = vcmask 261120
          %v613 = vsel %vm611, %v603, 0
          %v616 = vsel %vm611, %v604, 0
          %v619 = vsel %vm611, %v605, 0
          %v622 = vsel %vm611, %v606, 0
          %624 = vmatprep.subr.mxu0 0.0
          %625 = vmatpush1.msra.mxu0 %v607
          %626 = vmatprep.subr.mxu0 0.0
          %627 = vmatpush1.msra.mxu0 %v608
          %628 = vmatprep.subr.mxu0 0.0
          %629 = vmatpush1.msra.mxu0 %v609
          %630 = vmatprep.subr.mxu0 0.0
          %631 = vmatpush1.msra.mxu0 %v610
          %632 = vmatprep.subr.mxu0 0.0
          %633 = vmatpush1.msra.mxu0 0.0
          %634 = vmatprep.subr.mxu0 0.0
          %635 = vmatpush1.msra.mxu0 0.0
          %636 = vmatprep.subr.mxu0 0.0
          %637 = vmatpush1.msra.mxu0 0.0
          %638 = vmatprep.subr.mxu0 0.0
          %639 = vmatpush1.msra.mxu0 0.0
          %640 = vmatprep.subr.mxu0 0.0
          %641 = vmatpush1.msra.mxu0 0.0
          %642 = vmatprep.subr.mxu0 0.0
          %643 = vmatpush1.msra.mxu0 0.0
          %644 = vmatprep.subr.mxu0 0.0
          %645 = vmatpush1.msra.mxu0 0.0
          %646 = vmatprep.subr.mxu0 0.0
          %647 = vmatpush1.msra.mxu0 0.0
          %648 = vmatprep.subr.mxu0 0.0
          %649 = vmatpush1.msra.mxu0 0.0
          %650 = vmatprep.subr.mxu0 0.0
          %651 = vmatpush1.msra.mxu0 0.0
          %652 = vmatprep.subr.mxu0 0.0
          %653 = vmatpush1.msra.mxu0 0.0
          %654 = vmatprep.subr.mxu0 0.0
          %655 = vmatpush1.msra.mxu0 0.0
          %656 = vmatprep.subr.mxu0 0.0
          %657 = vmatpush1.msra.mxu0 0.0
          %658 = vmatprep.subr.mxu0 0.0
          %659 = vmatpush1.msra.mxu0 0.0
          %660 = vmatprep.subr.mxu0 0.0
          %661 = vmatpush1.msra.mxu0 0.0
          %662 = vmatprep.subr.mxu0 0.0
          %663 = vmatpush1.msra.mxu0 0.0
          %664 = vmatprep.subr.mxu0 0.0
          %665 = vmatpush1.msra.mxu0 0.0
          %666 = vmatprep.subr.mxu0 0.0
          %667 = vmatpush1.msra.mxu0 0.0
          %668 = vmatprep.subr.mxu0 0.0
          %669 = vmatpush1.msra.mxu0 0.0
          %670 = vmatprep.subr.mxu0 0.0
          %671 = vmatpush1.msra.mxu0 0.0
          %672 = vmatprep.subr.mxu0 0.0
          %673 = vmatpush1.msra.mxu0 0.0
          %674 = vmatprep.subr.mxu0 0.0
          %675 = vmatpush1.msra.mxu0 0.0
          %676 = vmatprep.subr.mxu0 0.0
          %677 = vmatpush1.msra.mxu0 0.0
          %678 = vmatprep.subr.mxu0 0.0
          %679 = vmatpush1.msra.mxu0 0.0
          %680 = vmatprep.subr.mxu0 0.0
          %681 = vmatpush1.msra.mxu0 0.0
          %682 = vmatprep.subr.mxu0 0.0
          %683 = vmatpush1.msra.mxu0 0.0
          %684 = vmatprep.subr.mxu0 0.0
          %685 = vmatpush1.msra.mxu0 0.0
          %686 = vmatprep.subr.mxu0 0.0
          %687 = vmatpush1.msra.mxu0 0.0
          %688 = vmatprep.mubr.f32.mxu0 0.0
          %689 = vmatmul.mubr.f32.gmra.mrb[0].mxu0 %v613
          %v690 = vpop.f32.mrb[0].mxu0
          %v691 = vadd.f32 0.0, %v690
          %v692 = vpop.f32.mrb[0].mxu0
          %693 = vmatprep.mubr.f32.mxu0 0.0
          %694 = vmatmul.mubr.f32.gmra.mrb[0].mxu0 %v616
          %v695 = vpop.f32.mrb[0].mxu0
          %v696 = vadd.f32 0.0, %v695
          %v697 = vpop.f32.mrb[0].mxu0
          %698 = vmatprep.mubr.f32.mxu0 0.0
          %699 = vmatmul.mubr.f32.gmra.mrb[0].mxu0 %v619
          %v700 = vpop.f32.mrb[0].mxu0
          %v701 = vadd.f32 0.0, %v700
          %v702 = vpop.f32.mrb[0].mxu0
          %703 = vmatprep.mubr.f32.mxu0 0.0
          %704 = vmatmul.mubr.f32.gmra.mrb[0].mxu0 %v622
          %v705 = vpop.f32.mrb[0].mxu0
          %v706 = vadd.f32 0.0, %v705
          %v707 = vpop.f32.mrb[0].mxu0
          %708 = vdwg.mxu0
          %vm709 = vcmask 523264
          %710 = vst.msk [vmem:[#allocation4] sm:$0xff] %vm709, %v691
          %711 = vst.msk [vmem:[#allocation4 + $0x8] sm:$0xff] %vm709, %v696
          %712 = vst.msk [vmem:[#allocation4 + $0x10] sm:$0xff] %vm709, %v701
          %713 = vst.msk [vmem:[#allocation4 + $0x18] sm:$0xff] %vm709, %v706
        $region72: #{hete_gnn_forward.1} parent=67 // pred_fallthru
          _
        %v714 = vld [vmem:[#allocation4] sm:$0xff]
        %v715 = vld [vmem:[#allocation4 + $0x8] sm:$0xff]
        %v716 = vld [vmem:[#allocation4 + $0x10] sm:$0xff]
        %v717 = vld [vmem:[#allocation4 + $0x18] sm:$0xff]
        %v718 = vld [vmem:[%s455] sm:$0x1]
        %v719 = vld [vmem:[%s440] sm:$0xf]
        %v720 = vld [vmem:[%s440 + $0x4] sm:$0xf]
        %v721 = vunpack.c.l.bf16 %v719
        %v722 = vunpack.c.l.bf16 %v720
        %v723 = vld [vmem:[%s446] sm:$0xf]
        %v724 = vld [vmem:[%s446 + $0x4] sm:$0xf]
        %v725 = vunpack.c.l.bf16 %v723
        %v726 = vunpack.c.l.bf16 %v724
        %v728 = vlaneseq
        %v729 = vshrl.u32 %v728, 7
        %v730 = vsub.s32 0, %v729
        %v731 = vrot.slane %v718, %v730
        %vm733 = vcmask 261120
        %v735 = vsel %vm733, %v721, 0
        %v738 = vsel %vm733, %v722, 0
        %740 = vmatprep.subr.mxu0 0.0
        %741 = vmatpush1.msra.mxu0 %v714
        %742 = vmatprep.subr.mxu0 0.0
        %743 = vmatpush1.msra.mxu0 %v715
        %744 = vmatprep.subr.mxu0 0.0
        %745 = vmatpush1.msra.mxu0 %v716
        %746 = vmatprep.subr.mxu0 0.0
        %747 = vmatpush1.msra.mxu0 %v717
        %748 = vmatprep.subr.mxu0 0.0
        %749 = vmatpush1.msra.mxu0 0.0
        %750 = vmatprep.subr.mxu0 0.0
        %751 = vmatpush1.msra.mxu0 0.0
        %752 = vmatprep.subr.mxu0 0.0
        %753 = vmatpush1.msra.mxu0 0.0
        %754 = vmatprep.subr.mxu0 0.0
        %755 = vmatpush1.msra.mxu0 0.0
        %756 = vmatprep.subr.mxu0 0.0
        %757 = vmatpush1.msra.mxu0 0.0
        %758 = vmatprep.subr.mxu0 0.0
        %759 = vmatpush1.msra.mxu0 0.0
        %760 = vmatprep.subr.mxu0 0.0
        %761 = vmatpush1.msra.mxu0 0.0
        %762 = vmatprep.subr.mxu0 0.0
        %763 = vmatpush1.msra.mxu0 0.0
        %764 = vmatprep.subr.mxu0 0.0
        %765 = vmatpush1.msra.mxu0 0.0
        %766 = vmatprep.subr.mxu0 0.0
        %767 = vmatpush1.msra.mxu0 0.0
        %768 = vmatprep.subr.mxu0 0.0
        %769 = vmatpush1.msra.mxu0 0.0
        %770 = vmatprep.subr.mxu0 0.0
        %771 = vmatpush1.msra.mxu0 0.0
        %772 = vmatprep.subr.mxu0 0.0
        %773 = vmatpush1.msra.mxu0 0.0
        %774 = vmatprep.subr.mxu0 0.0
        %775 = vmatpush1.msra.mxu0 0.0
        %776 = vmatprep.subr.mxu0 0.0
        %777 = vmatpush1.msra.mxu0 0.0
        %778 = vmatprep.subr.mxu0 0.0
        %779 = vmatpush1.msra.mxu0 0.0
        %780 = vmatprep.subr.mxu0 0.0
        %781 = vmatpush1.msra.mxu0 0.0
        %782 = vmatprep.subr.mxu0 0.0
        %783 = vmatpush1.msra.mxu0 0.0
        %784 = vmatprep.subr.mxu0 0.0
        %785 = vmatpush1.msra.mxu0 0.0
        %786 = vmatprep.subr.mxu0 0.0
        %787 = vmatpush1.msra.mxu0 0.0
        %788 = vmatprep.subr.mxu0 0.0
        %789 = vmatpush1.msra.mxu0 0.0
        %790 = vmatprep.subr.mxu0 0.0
        %791 = vmatpush1.msra.mxu0 0.0
        %792 = vmatprep.subr.mxu0 0.0
        %793 = vmatpush1.msra.mxu0 0.0
        %794 = vmatprep.subr.mxu0 0.0
        %795 = vmatpush1.msra.mxu0 0.0
        %796 = vmatprep.subr.mxu0 0.0
        %797 = vmatpush1.msra.mxu0 0.0
        %798 = vmatprep.subr.mxu0 0.0
        %799 = vmatpush1.msra.mxu0 0.0
        %800 = vmatprep.subr.mxu0 0.0
        %801 = vmatpush1.msra.mxu0 0.0
        %802 = vmatprep.subr.mxu0 0.0
        %803 = vmatpush1.msra.mxu0 0.0
        %804 = vmatprep.mubr.f32.mxu0 0.0
        %805 = vmatmul.mubr.f32.gmra.mrb[0].mxu0 %v735
        %v806 = vpop.f32.mrb[0].mxu0
        %v807 = vadd.f32 %v731, %v806
        %v808 = vpop.f32.mrb[0].mxu0
        %809 = vmatprep.mubr.f32.mxu0 0.0
        %810 = vmatmul.mubr.f32.gmra.mrb[0].mxu0 %v738
        %v811 = vpop.f32.mrb[0].mxu0
        %v812 = vadd.f32 %v731, %v811
        %v813 = vpop.f32.mrb[0].mxu0
        %814 = vdwg.mxu0
        %v815 = vmax.f32 %v807, 0.0
        %v816 = vmax.f32 %v812, 0.0
        %821 = vrot.lane.b32.xlu0 %v714, 96
        %v822 = vpop.permute.xlu0 %821
        %823 = vrot.lane.b32.xlu0 %v715, 96
        %v824 = vpop.permute.xlu0 %823
        %825 = vrot.lane.b32.xlu0 %v716, 96
        %v826 = vpop.permute.xlu0 %825
        %827 = vrot.lane.b32.xlu0 %v717, 96
        %v828 = vpop.permute.xlu0 %827
        %833 = vrot.lane.b32.xlu0 %v731, 96
        %v834 = vpop.permute.xlu0 %833
        %v837 = vsel %vm733, %v725, 0
        %v840 = vsel %vm733, %v726, 0
        %842 = vmatprep.subr.mxu0 0.0
        %843 = vmatpush1.msra.mxu0 %v822
        %844 = vmatprep.subr.mxu0 0.0
        %845 = vmatpush1.msra.mxu0 %v824
        %846 = vmatprep.subr.mxu0 0.0
        %847 = vmatpush1.msra.mxu0 %v826
        %848 = vmatprep.subr.mxu0 0.0
        %849 = vmatpush1.msra.mxu0 %v828
        %850 = vmatprep.subr.mxu0 0.0
        %851 = vmatpush1.msra.mxu0 0.0
        %852 = vmatprep.subr.mxu0 0.0
        %853 = vmatpush1.msra.mxu0 0.0
        %854 = vmatprep.subr.mxu0 0.0
        %855 = vmatpush1.msra.mxu0 0.0
        %856 = vmatprep.subr.mxu0 0.0
        %857 = vmatpush1.msra.mxu0 0.0
        %858 = vmatprep.subr.mxu0 0.0
        %859 = vmatpush1.msra.mxu0 0.0
        %860 = vmatprep.subr.mxu0 0.0
        %861 = vmatpush1.msra.mxu0 0.0
        %862 = vmatprep.subr.mxu0 0.0
        %863 = vmatpush1.msra.mxu0 0.0
        %864 = vmatprep.subr.mxu0 0.0
        %865 = vmatpush1.msra.mxu0 0.0
        %866 = vmatprep.subr.mxu0 0.0
        %867 = vmatpush1.msra.mxu0 0.0
        %868 = vmatprep.subr.mxu0 0.0
        %869 = vmatpush1.msra.mxu0 0.0
        %870 = vmatprep.subr.mxu0 0.0
        %871 = vmatpush1.msra.mxu0 0.0
        %872 = vmatprep.subr.mxu0 0.0
        %873 = vmatpush1.msra.mxu0 0.0
        %874 = vmatprep.subr.mxu0 0.0
        %875 = vmatpush1.msra.mxu0 0.0
        %876 = vmatprep.subr.mxu0 0.0
        %877 = vmatpush1.msra.mxu0 0.0
        %878 = vmatprep.subr.mxu0 0.0
        %879 = vmatpush1.msra.mxu0 0.0
        %880 = vmatprep.subr.mxu0 0.0
        %881 = vmatpush1.msra.mxu0 0.0
        %882 = vmatprep.subr.mxu0 0.0
        %883 = vmatpush1.msra.mxu0 0.0
        %884 = vmatprep.subr.mxu0 0.0
        %885 = vmatpush1.msra.mxu0 0.0
        %886 = vmatprep.subr.mxu0 0.0
        %887 = vmatpush1.msra.mxu0 0.0
        %888 = vmatprep.subr.mxu0 0.0
        %889 = vmatpush1.msra.mxu0 0.0
        %890 = vmatprep.subr.mxu0 0.0
        %891 = vmatpush1.msra.mxu0 0.0
        %892 = vmatprep.subr.mxu0 0.0
        %893 = vmatpush1.msra.mxu0 0.0
        %894 = vmatprep.subr.mxu0 0.0
        %895 = vmatpush1.msra.mxu0 0.0
        %896 = vmatprep.subr.mxu0 0.0
        %897 = vmatpush1.msra.mxu0 0.0
        %898 = vmatprep.subr.mxu0 0.0
        %899 = vmatpush1.msra.mxu0 0.0
        %900 = vmatprep.subr.mxu0 0.0
        %901 = vmatpush1.msra.mxu0 0.0
        %902 = vmatprep.subr.mxu0 0.0
        %903 = vmatpush1.msra.mxu0 0.0
        %904 = vmatprep.subr.mxu0 0.0
        %905 = vmatpush1.msra.mxu0 0.0
        %906 = vmatprep.mubr.f32.mxu0 0.0
        %907 = vmatmul.mubr.f32.gmra.mrb[0].mxu0 %v837
        %v908 = vpop.f32.mrb[0].mxu0
        %v909 = vadd.f32 %v834, %v908
        %v910 = vpop.f32.mrb[0].mxu0
        %911 = vmatprep.mubr.f32.mxu0 0.0
        %912 = vmatmul.mubr.f32.gmra.mrb[0].mxu0 %v840
        %v913 = vpop.f32.mrb[0].mxu0
        %v914 = vadd.f32 %v834, %v913
        %v915 = vpop.f32.mrb[0].mxu0
        %916 = vdwg.mxu0
        %v917 = vmax.f32 %v909, 0.0
        %v918 = vmax.f32 %v914, 0.0
        %v919 = vld [vmem:[%s460] sm:$0xff]
        %v920 = vld [vmem:[%s460 + $0x8] sm:$0xff]
        %v921 = vld [vmem:[%s460 + $0x10] sm:$0xff]
        %v922 = vld [vmem:[%s460 + $0x18] sm:$0xff]
        %v923 = vld [vmem:[%s465] sm:$0xff]
        %v924 = vld [vmem:[%s465 + $0x8] sm:$0xff]
        %v925 = vld [vmem:[%s465 + $0x10] sm:$0xff]
        %v926 = vld [vmem:[%s465 + $0x18] sm:$0xff]
        %v928 = vsel %vm733, %v917, 0
        %v931 = vsel %vm733, %v918, 0
        %933 = vmatprep.subr.mxu0 0.0
        %934 = vmatpush1.msra.mxu0 %v923
        %935 = vmatprep.subr.mxu0 0.0
        %936 = vmatpush1.msra.mxu0 %v924
        %937 = vmatprep.subr.mxu0 0.0
        %938 = vmatpush1.msra.mxu0 %v925
        %939 = vmatprep.subr.mxu0 0.0
        %940 = vmatpush1.msra.mxu0 %v926
        %941 = vmatprep.subr.mxu0 0.0
        %942 = vmatpush1.msra.mxu0 0.0
        %943 = vmatprep.subr.mxu0 0.0
        %944 = vmatpush1.msra.mxu0 0.0
        %945 = vmatprep.subr.mxu0 0.0
        %946 = vmatpush1.msra.mxu0 0.0
        %947 = vmatprep.subr.mxu0 0.0
        %948 = vmatpush1.msra.mxu0 0.0
        %949 = vmatprep.subr.mxu0 0.0
        %950 = vmatpush1.msra.mxu0 0.0
        %951 = vmatprep.subr.mxu0 0.0
        %952 = vmatpush1.msra.mxu0 0.0
        %953 = vmatprep.subr.mxu0 0.0
        %954 = vmatpush1.msra.mxu0 0.0
        %955 = vmatprep.subr.mxu0 0.0
        %956 = vmatpush1.msra.mxu0 0.0
        %957 = vmatprep.subr.mxu0 0.0
        %958 = vmatpush1.msra.mxu0 0.0
        %959 = vmatprep.subr.mxu0 0.0
        %960 = vmatpush1.msra.mxu0 0.0
        %961 = vmatprep.subr.mxu0 0.0
        %962 = vmatpush1.msra.mxu0 0.0
        %963 = vmatprep.subr.mxu0 0.0
        %964 = vmatpush1.msra.mxu0 0.0
        %965 = vmatprep.subr.mxu0 0.0
        %966 = vmatpush1.msra.mxu0 0.0
        %967 = vmatprep.subr.mxu0 0.0
        %968 = vmatpush1.msra.mxu0 0.0
        %969 = vmatprep.subr.mxu0 0.0
        %970 = vmatpush1.msra.mxu0 0.0
        %971 = vmatprep.subr.mxu0 0.0
        %972 = vmatpush1.msra.mxu0 0.0
        %973 = vmatprep.subr.mxu0 0.0
        %974 = vmatpush1.msra.mxu0 0.0
        %975 = vmatprep.subr.mxu0 0.0
        %976 = vmatpush1.msra.mxu0 0.0
        %977 = vmatprep.subr.mxu0 0.0
        %978 = vmatpush1.msra.mxu0 0.0
        %979 = vmatprep.subr.mxu0 0.0
        %980 = vmatpush1.msra.mxu0 0.0
        %981 = vmatprep.subr.mxu0 0.0
        %982 = vmatpush1.msra.mxu0 0.0
        %983 = vmatprep.subr.mxu0 0.0
        %984 = vmatpush1.msra.mxu0 0.0
        %985 = vmatprep.subr.mxu0 0.0
        %986 = vmatpush1.msra.mxu0 0.0
        %987 = vmatprep.subr.mxu0 0.0
        %988 = vmatpush1.msra.mxu0 0.0
        %989 = vmatprep.subr.mxu0 0.0
        %990 = vmatpush1.msra.mxu0 0.0
        %991 = vmatprep.subr.mxu0 0.0
        %992 = vmatpush1.msra.mxu0 0.0
        %993 = vmatprep.subr.mxu0 0.0
        %994 = vmatpush1.msra.mxu0 0.0
        %995 = vmatprep.subr.mxu0 0.0
        %996 = vmatpush1.msra.mxu0 0.0
        %997 = vmatprep.mubr.f32.mxu0 0.0
        %998 = vmatmul.mubr.f32.gmra.mrb[0].mxu0 %v928
        %v999 = vpop.f32.mrb[0].mxu0
        %v1000 = vadd.f32 0.0, %v999
        %v1001 = vpop.f32.mrb[0].mxu0
        %1002 = vmatprep.mubr.f32.mxu0 0.0
        %1003 = vmatmul.mubr.f32.gmra.mrb[0].mxu0 %v931
        %v1004 = vpop.f32.mrb[0].mxu0
        %v1005 = vadd.f32 0.0, %v1004
        %v1006 = vpop.f32.mrb[0].mxu0
        %1007 = vdwg.mxu0
        %v1009 = vsel %vm733, %v815, 0
        %v1012 = vsel %vm733, %v816, 0
        %1014 = vmatprep.subr.mxu0 0.0
        %1015 = vmatpush1.msra.mxu0 %v919
        %1016 = vmatprep.subr.mxu0 0.0
        %1017 = vmatpush1.msra.mxu0 %v920
        %1018 = vmatprep.subr.mxu0 0.0
        %1019 = vmatpush1.msra.mxu0 %v921
        %1020 = vmatprep.subr.mxu0 0.0
        %1021 = vmatpush1.msra.mxu0 %v922
        %1022 = vmatprep.subr.mxu0 0.0
        %1023 = vmatpush1.msra.mxu0 0.0
        %1024 = vmatprep.subr.mxu0 0.0
        %1025 = vmatpush1.msra.mxu0 0.0
        %1026 = vmatprep.subr.mxu0 0.0
        %1027 = vmatpush1.msra.mxu0 0.0
        %1028 = vmatprep.subr.mxu0 0.0
        %1029 = vmatpush1.msra.mxu0 0.0
        %1030 = vmatprep.subr.mxu0 0.0
        %1031 = vmatpush1.msra.mxu0 0.0
        %1032 = vmatprep.subr.mxu0 0.0
        %1033 = vmatpush1.msra.mxu0 0.0
        %1034 = vmatprep.subr.mxu0 0.0
        %1035 = vmatpush1.msra.mxu0 0.0
        %1036 = vmatprep.subr.mxu0 0.0
        %1037 = vmatpush1.msra.mxu0 0.0
        %1038 = vmatprep.subr.mxu0 0.0
        %1039 = vmatpush1.msra.mxu0 0.0
        %1040 = vmatprep.subr.mxu0 0.0
        %1041 = vmatpush1.msra.mxu0 0.0
        %1042 = vmatprep.subr.mxu0 0.0
        %1043 = vmatpush1.msra.mxu0 0.0
        %1044 = vmatprep.subr.mxu0 0.0
        %1045 = vmatpush1.msra.mxu0 0.0
        %1046 = vmatprep.subr.mxu0 0.0
        %1047 = vmatpush1.msra.mxu0 0.0
        %1048 = vmatprep.subr.mxu0 0.0
        %1049 = vmatpush1.msra.mxu0 0.0
        %1050 = vmatprep.subr.mxu0 0.0
        %1051 = vmatpush1.msra.mxu0 0.0
        %1052 = vmatprep.subr.mxu0 0.0
        %1053 = vmatpush1.msra.mxu0 0.0
        %1054 = vmatprep.subr.mxu0 0.0
        %1055 = vmatpush1.msra.mxu0 0.0
        %1056 = vmatprep.subr.mxu0 0.0
        %1057 = vmatpush1.msra.mxu0 0.0
        %1058 = vmatprep.subr.mxu0 0.0
        %1059 = vmatpush1.msra.mxu0 0.0
        %1060 = vmatprep.subr.mxu0 0.0
        %1061 = vmatpush1.msra.mxu0 0.0
        %1062 = vmatprep.subr.mxu0 0.0
        %1063 = vmatpush1.msra.mxu0 0.0
        %1064 = vmatprep.subr.mxu0 0.0
        %1065 = vmatpush1.msra.mxu0 0.0
        %1066 = vmatprep.subr.mxu0 0.0
        %1067 = vmatpush1.msra.mxu0 0.0
        %1068 = vmatprep.subr.mxu0 0.0
        %1069 = vmatpush1.msra.mxu0 0.0
        %1070 = vmatprep.subr.mxu0 0.0
        %1071 = vmatpush1.msra.mxu0 0.0
        %1072 = vmatprep.subr.mxu0 0.0
        %1073 = vmatpush1.msra.mxu0 0.0
        %1074 = vmatprep.subr.mxu0 0.0
        %1075 = vmatpush1.msra.mxu0 0.0
        %1076 = vmatprep.subr.mxu0 0.0
        %1077 = vmatpush1.msra.mxu0 0.0
        %1078 = vmatprep.mubr.f32.mxu0 0.0
        %1079 = vmatmul.mubr.f32.gmra.mrb[0].mxu0 %v1009
        %v1080 = vpop.f32.mrb[0].mxu0
        %v1081 = vadd.f32 %v1000, %v1080
        %v1082 = vpop.f32.mrb[0].mxu0
        %1083 = vmatprep.mubr.f32.mxu0 0.0
        %1084 = vmatmul.mubr.f32.gmra.mrb[0].mxu0 %v1012
        %v1085 = vpop.f32.mrb[0].mxu0
        %v1086 = vadd.f32 %v1005, %v1085
        %v1087 = vpop.f32.mrb[0].mxu0
        %1088 = vdwg.mxu0
        %v1089 = vld [vmem:[%s468] sm:$0x1]
        %v1091 = vlaneseq
        %v1092 = vshrl.u32 %v1091, 7
        %v1093 = vsub.s32 0, %v1092
        %v1094 = vrot.slane %v1089, %v1093
        %v1096 = vadd.f32 %v1081, %v1094
        %v1097 = vadd.f32 %v1086, %v1094
        %p1098 = scmp.lt.s32.totalorder %s25, 1
        %v1099 = vmax.f32 %v1096, 0.0
        %v1100 = vmax.f32 %v1097, 0.0
        %s1101 = scalar_select %p1098, 1, 0
        %v1102 = vstv %s1101
        %vm1103 = vcmp.eq.s32.totalorder %v1102, 1
        %v1104 = vsel %vm1103, %v1099, %v1096
        %v1105 = vsel %vm1103, %v1100, %v1097
        %s1106 = smul.u32 %s26, 16
        %s1107 = scalar_lea.vmem [#allocation3], %s1106
        %1108 = vst.msk [vmem:[%s1107] sm:$0xff] %vm733, %v1104
        %1109 = vst.msk [vmem:[%s1107 + $0x8] sm:$0xff] %vm733, %v1105
      $region68: #{hete_gnn_forward.1} parent=59 // pred_fallthru
        _
      %p1110 = scmp.eq.s32.totalorder %s595, 1
      // Predicated region
      $region73: #{hete_gnn_forward.1} parent=59 // pred_check
        %p1111 = pneg %p1110
      $region74: #{hete_gnn_forward.1} parent=59 // pred_check_branch
        %1113 = sbr.rel (%p1111) target = $region76
      $region75: #{hete_gnn_forward.1} parent=59 // pred_region
        // Predicated region
        $region77: #{hete_gnn_forward.1} parent=75 // pred_check
          %p1114 = pneg %p470
        $region78: #{hete_gnn_forward.1} parent=75 // pred_check_branch
          %1116 = sbr.rel (%p1114) target = $region80
        $region79: #{hete_gnn_forward.1} parent=75 // pred_region
          %v1117 = vld [vmem:[#allocation3] sm:$0xff]
          %v1118 = vld [vmem:[#allocation3 + $0x8] sm:$0xff]
          %v1119 = vld [vmem:[#allocation3 + $0x10] sm:$0xff]
          %v1120 = vld [vmem:[#allocation3 + $0x18] sm:$0xff]
          %v1121 = vld [vmem:[%s452] sm:$0xff]
          %v1122 = vld [vmem:[%s452 + $0x8] sm:$0xff]
          %v1123 = vld [vmem:[%s452 + $0x10] sm:$0xff]
          %v1124 = vld [vmem:[%s452 + $0x18] sm:$0xff]
          %vm1125 = vcmask 261120
          %v1127 = vsel %vm1125, %v1117, 0
          %v1130 = vsel %vm1125, %v1118, 0
          %v1133 = vsel %vm1125, %v1119, 0
          %v1136 = vsel %vm1125, %v1120, 0
          %1138 = vmatprep.subr.mxu0 0.0
          %1139 = vmatpush1.msra.mxu0 %v1121
          %1140 = vmatprep.subr.mxu0 0.0
          %1141 = vmatpush1.msra.mxu0 %v1122
          %1142 = vmatprep.subr.mxu0 0.0
          %1143 = vmatpush1.msra.mxu0 %v1123
          %1144 = vmatprep.subr.mxu0 0.0
          %1145 = vmatpush1.msra.mxu0 %v1124
          %1146 = vmatprep.subr.mxu0 0.0
          %1147 = vmatpush1.msra.mxu0 0.0
          %1148 = vmatprep.subr.mxu0 0.0
          %1149 = vmatpush1.msra.mxu0 0.0
          %1150 = vmatprep.subr.mxu0 0.0
          %1151 = vmatpush1.msra.mxu0 0.0
          %1152 = vmatprep.subr.mxu0 0.0
          %1153 = vmatpush1.msra.mxu0 0.0
          %1154 = vmatprep.subr.mxu0 0.0
          %1155 = vmatpush1.msra.mxu0 0.0
          %1156 = vmatprep.subr.mxu0 0.0
          %1157 = vmatpush1.msra.mxu0 0.0
          %1158 = vmatprep.subr.mxu0 0.0
          %1159 = vmatpush1.msra.mxu0 0.0
          %1160 = vmatprep.subr.mxu0 0.0
          %1161 = vmatpush1.msra.mxu0 0.0
          %1162 = vmatprep.subr.mxu0 0.0
          %1163 = vmatpush1.msra.mxu0 0.0
          %1164 = vmatprep.subr.mxu0 0.0
          %1165 = vmatpush1.msra.mxu0 0.0
          %1166 = vmatprep.subr.mxu0 0.0
          %1167 = vmatpush1.msra.mxu0 0.0
          %1168 = vmatprep.subr.mxu0 0.0
          %1169 = vmatpush1.msra.mxu0 0.0
          %1170 = vmatprep.subr.mxu0 0.0
          %1171 = vmatpush1.msra.mxu0 0.0
          %1172 = vmatprep.subr.mxu0 0.0
          %1173 = vmatpush1.msra.mxu0 0.0
          %1174 = vmatprep.subr.mxu0 0.0
          %1175 = vmatpush1.msra.mxu0 0.0
          %1176 = vmatprep.subr.mxu0 0.0
          %1177 = vmatpush1.msra.mxu0 0.0
          %1178 = vmatprep.subr.mxu0 0.0
          %1179 = vmatpush1.msra.mxu0 0.0
          %1180 = vmatprep.subr.mxu0 0.0
          %1181 = vmatpush1.msra.mxu0 0.0
          %1182 = vmatprep.subr.mxu0 0.0
          %1183 = vmatpush1.msra.mxu0 0.0
          %1184 = vmatprep.subr.mxu0 0.0
          %1185 = vmatpush1.msra.mxu0 0.0
          %1186 = vmatprep.subr.mxu0 0.0
          %1187 = vmatpush1.msra.mxu0 0.0
          %1188 = vmatprep.subr.mxu0 0.0
          %1189 = vmatpush1.msra.mxu0 0.0
          %1190 = vmatprep.subr.mxu0 0.0
          %1191 = vmatpush1.msra.mxu0 0.0
          %1192 = vmatprep.subr.mxu0 0.0
          %1193 = vmatpush1.msra.mxu0 0.0
          %1194 = vmatprep.subr.mxu0 0.0
          %1195 = vmatpush1.msra.mxu0 0.0
          %1196 = vmatprep.subr.mxu0 0.0
          %1197 = vmatpush1.msra.mxu0 0.0
          %1198 = vmatprep.subr.mxu0 0.0
          %1199 = vmatpush1.msra.mxu0 0.0
          %1200 = vmatprep.subr.mxu0 0.0
          %1201 = vmatpush1.msra.mxu0 0.0
          %1202 = vmatprep.mubr.f32.mxu0 0.0
          %1203 = vmatmul.mubr.f32.gmra.mrb[0].mxu0 %v1127
          %v1204 = vpop.f32.mrb[0].mxu0
          %v1205 = vadd.f32 0.0, %v1204
          %v1206 = vpop.f32.mrb[0].mxu0
          %1207 = vmatprep.mubr.f32.mxu0 0.0
          %1208 = vmatmul.mubr.f32.gmra.mrb[0].mxu0 %v1130
          %v1209 = vpop.f32.mrb[0].mxu0
          %v1210 = vadd.f32 0.0, %v1209
          %v1211 = vpop.f32.mrb[0].mxu0
          %1212 = vmatprep.mubr.f32.mxu0 0.0
          %1213 = vmatmul.mubr.f32.gmra.mrb[0].mxu0 %v1133
          %v1214 = vpop.f32.mrb[0].mxu0
          %v1215 = vadd.f32 0.0, %v1214
          %v1216 = vpop.f32.mrb[0].mxu0
          %1217 = vmatprep.mubr.f32.mxu0 0.0
          %1218 = vmatmul.mubr.f32.gmra.mrb[0].mxu0 %v1136
          %v1219 = vpop.f32.mrb[0].mxu0
          %v1220 = vadd.f32 0.0, %v1219
          %v1221 = vpop.f32.mrb[0].mxu0
          %1222 = vdwg.mxu0
          %vm1223 = vcmask 523264
          %1224 = vst.msk [vmem:[#allocation4] sm:$0xff] %vm1223, %v1205
          %1225 = vst.msk [vmem:[#allocation4 + $0x8] sm:$0xff] %vm1223, %v1210
          %1226 = vst.msk [vmem:[#allocation4 + $0x10] sm:$0xff] %vm1223, %v1215
          %1227 = vst.msk [vmem:[#allocation4 + $0x18] sm:$0xff] %vm1223, %v1220
        $region80: #{hete_gnn_forward.1} parent=75 // pred_fallthru
          _
        %v1228 = vld [vmem:[#allocation4] sm:$0xff]
        %v1229 = vld [vmem:[#allocation4 + $0x8] sm:$0xff]
        %v1230 = vld [vmem:[#allocation4 + $0x10] sm:$0xff]
        %v1231 = vld [vmem:[#allocation4 + $0x18] sm:$0xff]
        %v1232 = vld [vmem:[%s455] sm:$0x1]
        %v1233 = vld [vmem:[%s440] sm:$0xf]
        %v1234 = vld [vmem:[%s440 + $0x4] sm:$0xf]
        %v1235 = vunpack.c.l.bf16 %v1233
        %v1236 = vunpack.c.l.bf16 %v1234
        %v1237 = vld [vmem:[%s446] sm:$0xf]
        %v1238 = vld [vmem:[%s446 + $0x4] sm:$0xf]
        %v1239 = vunpack.c.l.bf16 %v1237
        %v1240 = vunpack.c.l.bf16 %v1238
        %v1242 = vlaneseq
        %v1243 = vshrl.u32 %v1242, 7
        %v1244 = vsub.s32 0, %v1243
        %v1245 = vrot.slane %v1232, %v1244
        %vm1247 = vcmask 261120
        %v1249 = vsel %vm1247, %v1235, 0
        %v1252 = vsel %vm1247, %v1236, 0
        %1254 = vmatprep.subr.mxu0 0.0
        %1255 = vmatpush1.msra.mxu0 %v1228
        %1256 = vmatprep.subr.mxu0 0.0
        %1257 = vmatpush1.msra.mxu0 %v1229
        %1258 = vmatprep.subr.mxu0 0.0
        %1259 = vmatpush1.msra.mxu0 %v1230
        %1260 = vmatprep.subr.mxu0 0.0
        %1261 = vmatpush1.msra.mxu0 %v1231
        %1262 = vmatprep.subr.mxu0 0.0
        %1263 = vmatpush1.msra.mxu0 0.0
        %1264 = vmatprep.subr.mxu0 0.0
        %1265 = vmatpush1.msra.mxu0 0.0
        %1266 = vmatprep.subr.mxu0 0.0
        %1267 = vmatpush1.msra.mxu0 0.0
        %1268 = vmatprep.subr.mxu0 0.0
        %1269 = vmatpush1.msra.mxu0 0.0
        %1270 = vmatprep.subr.mxu0 0.0
        %1271 = vmatpush1.msra.mxu0 0.0
        %1272 = vmatprep.subr.mxu0 0.0
        %1273 = vmatpush1.msra.mxu0 0.0
        %1274 = vmatprep.subr.mxu0 0.0
        %1275 = vmatpush1.msra.mxu0 0.0
        %1276 = vmatprep.subr.mxu0 0.0
        %1277 = vmatpush1.msra.mxu0 0.0
        %1278 = vmatprep.subr.mxu0 0.0
        %1279 = vmatpush1.msra.mxu0 0.0
        %1280 = vmatprep.subr.mxu0 0.0
        %1281 = vmatpush1.msra.mxu0 0.0
        %1282 = vmatprep.subr.mxu0 0.0
        %1283 = vmatpush1.msra.mxu0 0.0
        %1284 = vmatprep.subr.mxu0 0.0
        %1285 = vmatpush1.msra.mxu0 0.0
        %1286 = vmatprep.subr.mxu0 0.0
        %1287 = vmatpush1.msra.mxu0 0.0
        %1288 = vmatprep.subr.mxu0 0.0
        %1289 = vmatpush1.msra.mxu0 0.0
        %1290 = vmatprep.subr.mxu0 0.0
        %1291 = vmatpush1.msra.mxu0 0.0
        %1292 = vmatprep.subr.mxu0 0.0
        %1293 = vmatpush1.msra.mxu0 0.0
        %1294 = vmatprep.subr.mxu0 0.0
        %1295 = vmatpush1.msra.mxu0 0.0
        %1296 = vmatprep.subr.mxu0 0.0
        %1297 = vmatpush1.msra.mxu0 0.0
        %1298 = vmatprep.subr.mxu0 0.0
        %1299 = vmatpush1.msra.mxu0 0.0
        %1300 = vmatprep.subr.mxu0 0.0
        %1301 = vmatpush1.msra.mxu0 0.0
        %1302 = vmatprep.subr.mxu0 0.0
        %1303 = vmatpush1.msra.mxu0 0.0
        %1304 = vmatprep.subr.mxu0 0.0
        %1305 = vmatpush1.msra.mxu0 0.0
        %1306 = vmatprep.subr.mxu0 0.0
        %1307 = vmatpush1.msra.mxu0 0.0
        %1308 = vmatprep.subr.mxu0 0.0
        %1309 = vmatpush1.msra.mxu0 0.0
        %1310 = vmatprep.subr.mxu0 0.0
        %1311 = vmatpush1.msra.mxu0 0.0
        %1312 = vmatprep.subr.mxu0 0.0
        %1313 = vmatpush1.msra.mxu0 0.0
        %1314 = vmatprep.subr.mxu0 0.0
        %1315 = vmatpush1.msra.mxu0 0.0
        %1316 = vmatprep.subr.mxu0 0.0
        %1317 = vmatpush1.msra.mxu0 0.0
        %1318 = vmatprep.mubr.f32.mxu0 0.0
        %1319 = vmatmul.mubr.f32.gmra.mrb[0].mxu0 %v1249
        %v1320 = vpop.f32.mrb[0].mxu0
        %v1321 = vadd.f32 %v1245, %v1320
        %v1322 = vpop.f32.mrb[0].mxu0
        %1323 = vmatprep.mubr.f32.mxu0 0.0
        %1324 = vmatmul.mubr.f32.gmra.mrb[0].mxu0 %v1252
        %v1325 = vpop.f32.mrb[0].mxu0
        %v1326 = vadd.f32 %v1245, %v1325
        %v1327 = vpop.f32.mrb[0].mxu0
        %1328 = vdwg.mxu0
        %v1329 = vmax.f32 %v1321, 0.0
        %v1330 = vmax.f32 %v1326, 0.0
        %1335 = vrot.lane.b32.xlu0 %v1228, 96
        %v1336 = vpop.permute.xlu0 %1335
        %1337 = vrot.lane.b32.xlu0 %v1229, 96
        %v1338 = vpop.permute.xlu0 %1337
        %1339 = vrot.lane.b32.xlu0 %v1230, 96
        %v1340 = vpop.permute.xlu0 %1339
        %1341 = vrot.lane.b32.xlu0 %v1231, 96
        %v1342 = vpop.permute.xlu0 %1341
        %1347 = vrot.lane.b32.xlu0 %v1245, 96
        %v1348 = vpop.permute.xlu0 %1347
        %v1351 = vsel %vm1247, %v1239, 0
        %v1354 = vsel %vm1247, %v1240, 0
        %1356 = vmatprep.subr.mxu0 0.0
        %1357 = vmatpush1.msra.mxu0 %v1336
        %1358 = vmatprep.subr.mxu0 0.0
        %1359 = vmatpush1.msra.mxu0 %v1338
        %1360 = vmatprep.subr.mxu0 0.0
        %1361 = vmatpush1.msra.mxu0 %v1340
        %1362 = vmatprep.subr.mxu0 0.0
        %1363 = vmatpush1.msra.mxu0 %v1342
        %1364 = vmatprep.subr.mxu0 0.0
        %1365 = vmatpush1.msra.mxu0 0.0
        %1366 = vmatprep.subr.mxu0 0.0
        %1367 = vmatpush1.msra.mxu0 0.0
        %1368 = vmatprep.subr.mxu0 0.0
        %1369 = vmatpush1.msra.mxu0 0.0
        %1370 = vmatprep.subr.mxu0 0.0
        %1371 = vmatpush1.msra.mxu0 0.0
        %1372 = vmatprep.subr.mxu0 0.0
        %1373 = vmatpush1.msra.mxu0 0.0
        %1374 = vmatprep.subr.mxu0 0.0
        %1375 = vmatpush1.msra.mxu0 0.0
        %1376 = vmatprep.subr.mxu0 0.0
        %1377 = vmatpush1.msra.mxu0 0.0
        %1378 = vmatprep.subr.mxu0 0.0
        %1379 = vmatpush1.msra.mxu0 0.0
        %1380 = vmatprep.subr.mxu0 0.0
        %1381 = vmatpush1.msra.mxu0 0.0
        %1382 = vmatprep.subr.mxu0 0.0
        %1383 = vmatpush1.msra.mxu0 0.0
        %1384 = vmatprep.subr.mxu0 0.0
        %1385 = vmatpush1.msra.mxu0 0.0
        %1386 = vmatprep.subr.mxu0 0.0
        %1387 = vmatpush1.msra.mxu0 0.0
        %1388 = vmatprep.subr.mxu0 0.0
        %1389 = vmatpush1.msra.mxu0 0.0
        %1390 = vmatprep.subr.mxu0 0.0
        %1391 = vmatpush1.msra.mxu0 0.0
        %1392 = vmatprep.subr.mxu0 0.0
        %1393 = vmatpush1.msra.mxu0 0.0
        %1394 = vmatprep.subr.mxu0 0.0
        %1395 = vmatpush1.msra.mxu0 0.0
        %1396 = vmatprep.subr.mxu0 0.0
        %1397 = vmatpush1.msra.mxu0 0.0
        %1398 = vmatprep.subr.mxu0 0.0
        %1399 = vmatpush1.msra.mxu0 0.0
        %1400 = vmatprep.subr.mxu0 0.0
        %1401 = vmatpush1.msra.mxu0 0.0
        %1402 = vmatprep.subr.mxu0 0.0
        %1403 = vmatpush1.msra.mxu0 0.0
        %1404 = vmatprep.subr.mxu0 0.0
        %1405 = vmatpush1.msra.mxu0 0.0
        %1406 = vmatprep.subr.mxu0 0.0
        %1407 = vmatpush1.msra.mxu0 0.0
        %1408 = vmatprep.subr.mxu0 0.0
        %1409 = vmatpush1.msra.mxu0 0.0
        %1410 = vmatprep.subr.mxu0 0.0
        %1411 = vmatpush1.msra.mxu0 0.0
        %1412 = vmatprep.subr.mxu0 0.0
        %1413 = vmatpush1.msra.mxu0 0.0
        %1414 = vmatprep.subr.mxu0 0.0
        %1415 = vmatpush1.msra.mxu0 0.0
        %1416 = vmatprep.subr.mxu0 0.0
        %1417 = vmatpush1.msra.mxu0 0.0
        %1418 = vmatprep.subr.mxu0 0.0
        %1419 = vmatpush1.msra.mxu0 0.0
        %1420 = vmatprep.mubr.f32.mxu0 0.0
        %1421 = vmatmul.mubr.f32.gmra.mrb[0].mxu0 %v1351
        %v1422 = vpop.f32.mrb[0].mxu0
        %v1423 = vadd.f32 %v1348, %v1422
        %v1424 = vpop.f32.mrb[0].mxu0
        %1425 = vmatprep.mubr.f32.mxu0 0.0
        %1426 = vmatmul.mubr.f32.gmra.mrb[0].mxu0 %v1354
        %v1427 = vpop.f32.mrb[0].mxu0
        %v1428 = vadd.f32 %v1348, %v1427
        %v1429 = vpop.f32.mrb[0].mxu0
        %1430 = vdwg.mxu0
        %v1431 = vmax.f32 %v1423, 0.0
        %v1432 = vmax.f32 %v1428, 0.0
        %v1433 = vld [vmem:[%s460] sm:$0xff]
        %v1434 = vld [vmem:[%s460 + $0x8] sm:$0xff]
        %v1435 = vld [vmem:[%s460 + $0x10] sm:$0xff]
        %v1436 = vld [vmem:[%s460 + $0x18] sm:$0xff]
        %v1437 = vld [vmem:[%s465] sm:$0xff]
        %v1438 = vld [vmem:[%s465 + $0x8] sm:$0xff]
        %v1439 = vld [vmem:[%s465 + $0x10] sm:$0xff]
        %v1440 = vld [vmem:[%s465 + $0x18] sm:$0xff]
        %v1442 = vsel %vm1247, %v1431, 0
        %v1445 = vsel %vm1247, %v1432, 0
        %1447 = vmatprep.subr.mxu0 0.0
        %1448 = vmatpush1.msra.mxu0 %v1437
        %1449 = vmatprep.subr.mxu0 0.0
        %1450 = vmatpush1.msra.mxu0 %v1438
        %1451 = vmatprep.subr.mxu0 0.0
        %1452 = vmatpush1.msra.mxu0 %v1439
        %1453 = vmatprep.subr.mxu0 0.0
        %1454 = vmatpush1.msra.mxu0 %v1440
        %1455 = vmatprep.subr.mxu0 0.0
        %1456 = vmatpush1.msra.mxu0 0.0
        %1457 = vmatprep.subr.mxu0 0.0
        %1458 = vmatpush1.msra.mxu0 0.0
        %1459 = vmatprep.subr.mxu0 0.0
        %1460 = vmatpush1.msra.mxu0 0.0
        %1461 = vmatprep.subr.mxu0 0.0
        %1462 = vmatpush1.msra.mxu0 0.0
        %1463 = vmatprep.subr.mxu0 0.0
        %1464 = vmatpush1.msra.mxu0 0.0
        %1465 = vmatprep.subr.mxu0 0.0
        %1466 = vmatpush1.msra.mxu0 0.0
        %1467 = vmatprep.subr.mxu0 0.0
        %1468 = vmatpush1.msra.mxu0 0.0
        %1469 = vmatprep.subr.mxu0 0.0
        %1470 = vmatpush1.msra.mxu0 0.0
        %1471 = vmatprep.subr.mxu0 0.0
        %1472 = vmatpush1.msra.mxu0 0.0
        %1473 = vmatprep.subr.mxu0 0.0
        %1474 = vmatpush1.msra.mxu0 0.0
        %1475 = vmatprep.subr.mxu0 0.0
        %1476 = vmatpush1.msra.mxu0 0.0
        %1477 = vmatprep.subr.mxu0 0.0
        %1478 = vmatpush1.msra.mxu0 0.0
        %1479 = vmatprep.subr.mxu0 0.0
        %1480 = vmatpush1.msra.mxu0 0.0
        %1481 = vmatprep.subr.mxu0 0.0
        %1482 = vmatpush1.msra.mxu0 0.0
        %1483 = vmatprep.subr.mxu0 0.0
        %1484 = vmatpush1.msra.mxu0 0.0
        %1485 = vmatprep.subr.mxu0 0.0
        %1486 = vmatpush1.msra.mxu0 0.0
        %1487 = vmatprep.subr.mxu0 0.0
        %1488 = vmatpush1.msra.mxu0 0.0
        %1489 = vmatprep.subr.mxu0 0.0
        %1490 = vmatpush1.msra.mxu0 0.0
        %1491 = vmatprep.subr.mxu0 0.0
        %1492 = vmatpush1.msra.mxu0 0.0
        %1493 = vmatprep.subr.mxu0 0.0
        %1494 = vmatpush1.msra.mxu0 0.0
        %1495 = vmatprep.subr.mxu0 0.0
        %1496 = vmatpush1.msra.mxu0 0.0
        %1497 = vmatprep.subr.mxu0 0.0
        %1498 = vmatpush1.msra.mxu0 0.0
        %1499 = vmatprep.subr.mxu0 0.0
        %1500 = vmatpush1.msra.mxu0 0.0
        %1501 = vmatprep.subr.mxu0 0.0
        %1502 = vmatpush1.msra.mxu0 0.0
        %1503 = vmatprep.subr.mxu0 0.0
        %1504 = vmatpush1.msra.mxu0 0.0
        %1505 = vmatprep.subr.mxu0 0.0
        %1506 = vmatpush1.msra.mxu0 0.0
        %1507 = vmatprep.subr.mxu0 0.0
        %1508 = vmatpush1.msra.mxu0 0.0
        %1509 = vmatprep.subr.mxu0 0.0
        %1510 = vmatpush1.msra.mxu0 0.0
        %1511 = vmatprep.mubr.f32.mxu0 0.0
        %1512 = vmatmul.mubr.f32.gmra.mrb[0].mxu0 %v1442
        %v1513 = vpop.f32.mrb[0].mxu0
        %v1514 = vadd.f32 0.0, %v1513
        %v1515 = vpop.f32.mrb[0].mxu0
        %1516 = vmatprep.mubr.f32.mxu0 0.0
        %1517 = vmatmul.mubr.f32.gmra.mrb[0].mxu0 %v1445
        %v1518 = vpop.f32.mrb[0].mxu0
        %v1519 = vadd.f32 0.0, %v1518
        %v1520 = vpop.f32.mrb[0].mxu0
        %1521 = vdwg.mxu0
        %v1523 = vsel %vm1247, %v1329, 0
        %v1526 = vsel %vm1247, %v1330, 0
        %1528 = vmatprep.subr.mxu0 0.0
        %1529 = vmatpush1.msra.mxu0 %v1433
        %1530 = vmatprep.subr.mxu0 0.0
        %1531 = vmatpush1.msra.mxu0 %v1434
        %1532 = vmatprep.subr.mxu0 0.0
        %1533 = vmatpush1.msra.mxu0 %v1435
        %1534 = vmatprep.subr.mxu0 0.0
        %1535 = vmatpush1.msra.mxu0 %v1436
        %1536 = vmatprep.subr.mxu0 0.0
        %1537 = vmatpush1.msra.mxu0 0.0
        %1538 = vmatprep.subr.mxu0 0.0
        %1539 = vmatpush1.msra.mxu0 0.0
        %1540 = vmatprep.subr.mxu0 0.0
        %1541 = vmatpush1.msra.mxu0 0.0
        %1542 = vmatprep.subr.mxu0 0.0
        %1543 = vmatpush1.msra.mxu0 0.0
        %1544 = vmatprep.subr.mxu0 0.0
        %1545 = vmatpush1.msra.mxu0 0.0
        %1546 = vmatprep.subr.mxu0 0.0
        %1547 = vmatpush1.msra.mxu0 0.0
        %1548 = vmatprep.subr.mxu0 0.0
        %1549 = vmatpush1.msra.mxu0 0.0
        %1550 = vmatprep.subr.mxu0 0.0
        %1551 = vmatpush1.msra.mxu0 0.0
        %1552 = vmatprep.subr.mxu0 0.0
        %1553 = vmatpush1.msra.mxu0 0.0
        %1554 = vmatprep.subr.mxu0 0.0
        %1555 = vmatpush1.msra.mxu0 0.0
        %1556 = vmatprep.subr.mxu0 0.0
        %1557 = vmatpush1.msra.mxu0 0.0
        %1558 = vmatprep.subr.mxu0 0.0
        %1559 = vmatpush1.msra.mxu0 0.0
        %1560 = vmatprep.subr.mxu0 0.0
        %1561 = vmatpush1.msra.mxu0 0.0
        %1562 = vmatprep.subr.mxu0 0.0
        %1563 = vmatpush1.msra.mxu0 0.0
        %1564 = vmatprep.subr.mxu0 0.0
        %1565 = vmatpush1.msra.mxu0 0.0
        %1566 = vmatprep.subr.mxu0 0.0
        %1567 = vmatpush1.msra.mxu0 0.0
        %1568 = vmatprep.subr.mxu0 0.0
        %1569 = vmatpush1.msra.mxu0 0.0
        %1570 = vmatprep.subr.mxu0 0.0
        %1571 = vmatpush1.msra.mxu0 0.0
        %1572 = vmatprep.subr.mxu0 0.0
        %1573 = vmatpush1.msra.mxu0 0.0
        %1574 = vmatprep.subr.mxu0 0.0
        %1575 = vmatpush1.msra.mxu0 0.0
        %1576 = vmatprep.subr.mxu0 0.0
        %1577 = vmatpush1.msra.mxu0 0.0
        %1578 = vmatprep.subr.mxu0 0.0
        %1579 = vmatpush1.msra.mxu0 0.0
        %1580 = vmatprep.subr.mxu0 0.0
        %1581 = vmatpush1.msra.mxu0 0.0
        %1582 = vmatprep.subr.mxu0 0.0
        %1583 = vmatpush1.msra.mxu0 0.0
        %1584 = vmatprep.subr.mxu0 0.0
        %1585 = vmatpush1.msra.mxu0 0.0
        %1586 = vmatprep.subr.mxu0 0.0
        %1587 = vmatpush1.msra.mxu0 0.0
        %1588 = vmatprep.subr.mxu0 0.0
        %1589 = vmatpush1.msra.mxu0 0.0
        %1590 = vmatprep.subr.mxu0 0.0
        %1591 = vmatpush1.msra.mxu0 0.0
        %1592 = vmatprep.mubr.f32.mxu0 0.0
        %1593 = vmatmul.mubr.f32.gmra.mrb[0].mxu0 %v1523
        %v1594 = vpop.f32.mrb[0].mxu0
        %v1595 = vadd.f32 %v1514, %v1594
        %v1596 = vpop.f32.mrb[0].mxu0
        %1597 = vmatprep.mubr.f32.mxu0 0.0
        %1598 = vmatmul.mubr.f32.gmra.mrb[0].mxu0 %v1526
        %v1599 = vpop.f32.mrb[0].mxu0
        %v1600 = vadd.f32 %v1519, %v1599
        %v1601 = vpop.f32.mrb[0].mxu0
        %1602 = vdwg.mxu0
        %v1603 = vld [vmem:[%s468] sm:$0x1]
        %v1605 = vlaneseq
        %v1606 = vshrl.u32 %v1605, 7
        %v1607 = vsub.s32 0, %v1606
        %v1608 = vrot.slane %v1603, %v1607
        %v1610 = vadd.f32 %v1595, %v1608
        %v1611 = vadd.f32 %v1600, %v1608
        %p1612 = scmp.lt.s32.totalorder %s25, 1
        %v1613 = vmax.f32 %v1610, 0.0
        %v1614 = vmax.f32 %v1611, 0.0
        %s1615 = scalar_select %p1612, 1, 0
        %v1616 = vstv %s1615
        %vm1617 = vcmp.eq.s32.totalorder %v1616, 1
        %v1618 = vsel %vm1617, %v1613, %v1610
        %v1619 = vsel %vm1617, %v1614, %v1611
        %s1620 = smul.u32 %s26, 16
        %s1621 = scalar_lea.vmem [#allocation2], %s1620
        %1622 = vst.msk [vmem:[%s1621] sm:$0xff] %vm1247, %v1618
        %1623 = vst.msk [vmem:[%s1621 + $0x8] sm:$0xff] %vm1247, %v1619
      $region76: #{hete_gnn_forward.1} parent=59 // pred_fallthru
        _
      %p1624 = scmp.eq.s32.totalorder %s25, 1
      %p1625 = scmp.eq.s32.totalorder %s26, 1
      %p1626 = pnand %p1624, %p1625
      %p1627 = pneg %p1626
      // Predicated region
      $region81: #{hete_gnn_forward.1} parent=59 // pred_check
        _
      $region82: #{hete_gnn_forward.1} parent=59 // pred_check_branch
        %1629 = sbr.rel (%p1626) target = $region84
      $region83: #{hete_gnn_forward.1} parent=59 // pred_region
        %v1630 = vld [vmem:[#allocation2] sm:$0xff]
        %v1631 = vld [vmem:[#allocation2 + $0x8] sm:$0xff]
        %v1632 = vld [vmem:[#allocation2 + $0x10] sm:$0xff]
        %v1633 = vld [vmem:[#allocation2 + $0x18] sm:$0xff]
        %v1634 = vlaneseq
        %v1635 = vshrl.u32 %v1634, 7
        %v1636 = vld [vmem:[%s1] sm:$0x1]
        %v1637 = vlaneseq
        %v1638 = vshrl.u32 %v1637, 7
        %v1639 = vsub.s32 0, %v1638
        %v1640 = vrot.slane %v1636, %v1639
        %vm1641 = vcmp.eq.s32.totalorder %v1640, %v1635
        %v1642 = vsel %vm1641, 1, 0
        %v1643 = vcvt.s32.f32 %v1642
        %vm1644 = vcmask 261120
        %v1646 = vsel %vm1644, %v1643, 0
        %1648 = vmatprep.subr.mxu0 0.0
        %1649 = vmatpush1.msra.mxu0 %v1630
        %1650 = vmatprep.subr.mxu0 0.0
        %1651 = vmatpush1.msra.mxu0 %v1631
        %1652 = vmatprep.subr.mxu0 0.0
        %1653 = vmatpush1.msra.mxu0 %v1632
        %1654 = vmatprep.subr.mxu0 0.0
        %1655 = vmatpush1.msra.mxu0 %v1633
        %1656 = vmatprep.subr.mxu0 0.0
        %1657 = vmatpush1.msra.mxu0 0.0
        %1658 = vmatprep.subr.mxu0 0.0
        %1659 = vmatpush1.msra.mxu0 0.0
        %1660 = vmatprep.subr.mxu0 0.0
        %1661 = vmatpush1.msra.mxu0 0.0
        %1662 = vmatprep.subr.mxu0 0.0
        %1663 = vmatpush1.msra.mxu0 0.0
        %1664 = vmatprep.subr.mxu0 0.0
        %1665 = vmatpush1.msra.mxu0 0.0
        %1666 = vmatprep.subr.mxu0 0.0
        %1667 = vmatpush1.msra.mxu0 0.0
        %1668 = vmatprep.subr.mxu0 0.0
        %1669 = vmatpush1.msra.mxu0 0.0
        %1670 = vmatprep.subr.mxu0 0.0
        %1671 = vmatpush1.msra.mxu0 0.0
        %1672 = vmatprep.subr.mxu0 0.0
        %1673 = vmatpush1.msra.mxu0 0.0
        %1674 = vmatprep.subr.mxu0 0.0
        %1675 = vmatpush1.msra.mxu0 0.0
        %1676 = vmatprep.subr.mxu0 0.0
        %1677 = vmatpush1.msra.mxu0 0.0
        %1678 = vmatprep.subr.mxu0 0.0
        %1679 = vmatpush1.msra.mxu0 0.0
        %1680 = vmatprep.subr.mxu0 0.0
        %1681 = vmatpush1.msra.mxu0 0.0
        %1682 = vmatprep.subr.mxu0 0.0
        %1683 = vmatpush1.msra.mxu0 0.0
        %1684 = vmatprep.subr.mxu0 0.0
        %1685 = vmatpush1.msra.mxu0 0.0
        %1686 = vmatprep.subr.mxu0 0.0
        %1687 = vmatpush1.msra.mxu0 0.0
        %1688 = vmatprep.subr.mxu0 0.0
        %1689 = vmatpush1.msra.mxu0 0.0
        %1690 = vmatprep.subr.mxu0 0.0
        %1691 = vmatpush1.msra.mxu0 0.0
        %1692 = vmatprep.subr.mxu0 0.0
        %1693 = vmatpush1.msra.mxu0 0.0
        %1694 = vmatprep.subr.mxu0 0.0
        %1695 = vmatpush1.msra.mxu0 0.0
        %1696 = vmatprep.subr.mxu0 0.0
        %1697 = vmatpush1.msra.mxu0 0.0
        %1698 = vmatprep.subr.mxu0 0.0
        %1699 = vmatpush1.msra.mxu0 0.0
        %1700 = vmatprep.subr.mxu0 0.0
        %1701 = vmatpush1.msra.mxu0 0.0
        %1702 = vmatprep.subr.mxu0 0.0
        %1703 = vmatpush1.msra.mxu0 0.0
        %1704 = vmatprep.subr.mxu0 0.0
        %1705 = vmatpush1.msra.mxu0 0.0
        %1706 = vmatprep.subr.mxu0 0.0
        %1707 = vmatpush1.msra.mxu0 0.0
        %1708 = vmatprep.subr.mxu0 0.0
        %1709 = vmatpush1.msra.mxu0 0.0
        %1710 = vmatprep.subr.mxu0 0.0
        %1711 = vmatpush1.msra.mxu0 0.0
        %1712 = vmatprep.mubr.f32.mxu0 0.0
        %1713 = vmatmul.mubr.f32.gmra.mrb[0].mxu0 %v1646
        %v1714 = vpop.f32.mrb[0].mxu0
        %v1715 = vadd.f32 0.0, %v1714
        %v1716 = vpop.f32.mrb[0].mxu0
        %1717 = vdwg.mxu0
        %vm1718 = vcmask 254976
        %v1719 = vsel %vm1718, %v1643, 0.0
        %1720 = vadd.xlane.f32.xlu0 %v1719
        %v1721 = vpop.xlane.xlu0 %1720
        %v1722 = vrcp.pop %v1721
        %v1723 = vmul.f32 %v1715, %v1722
        %1724 = vxpose.xlu0.b32.start [1/16] %v1630, 128
        %1725 = vxpose.xlu0.b32.cont [2/16] %v1631, 128
        %1726 = vxpose.xlu0.b32.cont [3/16] %v1632, 128
        %1727 = vxpose.xlu0.b32.cont [4/16] %v1633, 128
        %1728 = vxpose.xlu0.b32.cont [5/16] 0.0, 128
        %1729 = vxpose.xlu0.b32.cont [6/16] 0.0, 128
        %1730 = vxpose.xlu0.b32.cont [7/16] 0.0, 128
        %1731 = vxpose.xlu0.b32.cont [8/16] 0.0, 128
        %1732 = vxpose.xlu0.b32.cont [9/16] 0.0, 128
        %1733 = vxpose.xlu0.b32.cont [10/16] 0.0, 128
        %1734 = vxpose.xlu0.b32.cont [11/16] 0.0, 128
        %1735 = vxpose.xlu0.b32.cont [12/16] 0.0, 128
        %1736 = vxpose.xlu0.b32.cont [13/16] 0.0, 128
        %1737 = vxpose.xlu0.b32.cont [14/16] 0.0, 128
        %1738 = vxpose.xlu0.b32.cont [15/16] 0.0, 128
        %1739 = vxpose.xlu0.b32.end [16/16] 0.0, 128
        %v1740 = vpop.trf.xlu0
        %v1741 = vpop.trf.xlu0
        %v1742 = vpop.trf.xlu0
        %v1743 = vpop.trf.xlu0
        %v1744 = vpop.trf.xlu0
        %v1745 = vpop.trf.xlu0
        %v1746 = vpop.trf.xlu0
        %v1747 = vpop.trf.xlu0
        %v1748 = vpop.trf.xlu0
        %v1749 = vpop.trf.xlu0
        %v1750 = vpop.trf.xlu0
        %v1751 = vpop.trf.xlu0
        %v1752 = vpop.trf.xlu0
        %v1753 = vpop.trf.xlu0
        %v1754 = vpop.trf.xlu0
        %v1755 = vpop.trf.xlu0
        %v1757 = vunpack.c.l.s4 1966171168
        %v1758 = vunpack.c.0.s8 %v1757
        %v1759 = vlaneseq
        %v1760 = vshrl.u32 %v1759, 7
        %v1761 = vsub.s32 %v1758, %v1760
        %v1762 = vrot.slane %v1642, %v1761
        %v1763 = vcombine.high %v1762, %v1762
        %v1765 = vunpack.c.l.s4 1966171168
        %v1766 = vunpack.c.0.s8 %v1765
        %v1767 = vlaneseq
        %v1768 = vshrl.u32 %v1767, 7
        %v1769 = vsub.s32 %v1766, %v1768
        %v1770 = vrot.slane %v1762, %v1769
        %v1772 = vunpack.c.l.s4 1966171168
        %v1773 = vunpack.c.0.s8 %v1772
        %v1774 = vlaneseq
        %v1775 = vshrl.u32 %v1774, 7
        %v1776 = vsub.s32 %v1773, %v1775
        %v1777 = vrot.slane %v1763, %v1776
        %vm1778 = vcmp.ne.s32.totalorder %v1770, 0
        %vm1779 = vcmp.ne.s32.totalorder %v1777, 0
        %v1780 = vsel %vm1778, 1, 0
        %v1781 = vsel %vm1779, 1, 0
        %v1782 = vlaneseq
        %v1783 = vshrl.u32 %v1782, 7
        %v1784 = vsub.s32 0, %v1783
        %v1785 = vrot.slane %v1780, %v1784
        %v1786 = vlaneseq
        %v1787 = vshrl.u32 %v1786, 7
        %v1788 = vsub.s32 0, %v1787
        %v1789 = vrot.slane %v1781, %v1788
        %vm1790 = vcmp.eq.s32.totalorder %v1785, 1
        %vm1791 = vcmp.eq.s32.totalorder %v1789, 1
        %v1792 = vsel %vm1790, %v1740, -inf
        %v1793 = vsel %vm1790, %v1741, -inf
        %v1794 = vsel %vm1790, %v1742, -inf
        %v1795 = vsel %vm1790, %v1743, -inf
        %v1796 = vsel %vm1791, %v1740, -inf
        %v1797 = vsel %vm1791, %v1741, -inf
        %v1798 = vsel %vm1791, %v1742, -inf
        %v1799 = vsel %vm1791, %v1743, -inf
        %v1800 = vsel %vm1644, %v1792, -inf
        %1801 = vmax.xlane.f32.xlu0 %v1800
        %v1802 = vpop.xlane.xlu0 %1801
        %v1803 = vsel %vm1644, %v1793, -inf
        %1804 = vmax.xlane.f32.xlu0 %v1803
        %v1805 = vpop.xlane.xlu0 %1804
        %v1806 = vsel %vm1644, %v1794, -inf
        %1807 = vmax.xlane.f32.xlu0 %v1806
        %v1808 = vpop.xlane.xlu0 %1807
        %v1809 = vsel %vm1644, %v1795, -inf
        %1810 = vmax.xlane.f32.xlu0 %v1809
        %v1811 = vpop.xlane.xlu0 %1810
        %v1812 = vsel %vm1644, %v1796, -inf
        %1813 = vmax.xlane.f32.xlu0 %v1812
        %v1814 = vpop.xlane.xlu0 %1813
        %v1815 = vsel %vm1644, %v1797, -inf
        %1816 = vmax.xlane.f32.xlu0 %v1815
        %v1817 = vpop.xlane.xlu0 %1816
        %v1818 = vsel %vm1644, %v1798, -inf
        %1819 = vmax.xlane.f32.xlu0 %v1818
        %v1820 = vpop.xlane.xlu0 %1819
        %v1821 = vsel %vm1644, %v1799, -inf
        %1822 = vmax.xlane.f32.xlu0 %v1821
        %v1823 = vpop.xlane.xlu0 %1822
        %v1824 = vsel %vm1790, %v1740, inf
        %v1825 = vsel %vm1790, %v1741, inf
        %v1826 = vsel %vm1790, %v1742, inf
        %v1827 = vsel %vm1790, %v1743, inf
        %v1828 = vsel %vm1791, %v1740, inf
        %v1829 = vsel %vm1791, %v1741, inf
        %v1830 = vsel %vm1791, %v1742, inf
        %v1831 = vsel %vm1791, %v1743, inf
        %v1832 = vsel %vm1644, %v1824, inf
        %1833 = vmin.xlane.f32.xlu0 %v1832
        %v1834 = vpop.xlane.xlu0 %1833
        %v1835 = vsel %vm1644, %v1825, inf
        %1836 = vmin.xlane.f32.xlu0 %v1835
        %v1837 = vpop.xlane.xlu0 %1836
        %v1838 = vsel %vm1644, %v1826, inf
        %1839 = vmin.xlane.f32.xlu0 %v1838
        %v1840 = vpop.xlane.xlu0 %1839
        %v1841 = vsel %vm1644, %v1827, inf
        %1842 = vmin.xlane.f32.xlu0 %v1841
        %v1843 = vpop.xlane.xlu0 %1842
        %v1844 = vsel %vm1644, %v1828, inf
        %1845 = vmin.xlane.f32.xlu0 %v1844
        %v1846 = vpop.xlane.xlu0 %1845
        %v1847 = vsel %vm1644, %v1829, inf
        %1848 = vmin.xlane.f32.xlu0 %v1847
        %v1849 = vpop.xlane.xlu0 %1848
        %v1850 = vsel %vm1644, %v1830, inf
        %1851 = vmin.xlane.f32.xlu0 %v1850
        %v1852 = vpop.xlane.xlu0 %1851
        %v1853 = vsel %vm1644, %v1831, inf
        %1854 = vmin.xlane.f32.xlu0 %v1853
        %v1855 = vpop.xlane.xlu0 %1854
        %1856 = vst.msk [vmem:[%s10] sm:$0x3] %vm1718, %v1715
        %1858 = vrot.lane.b32.xlu0 %v1723, 32
        %v1859 = vpop.permute.xlu0 %1858
        %vm1861 = vcmask 517376
        %1862 = vst.msk [vmem:[%s10] sm:$0x3] %vm1861, %v1859
        %v1871 = vlaneseq
        %v1872 = vand.u32 %v1871, 127
        %v1873 = vadd.s32 %v1872, 4294967232
        %v1874 = vlaneseq
        %v1875 = vshrl.u32 %v1874, 7
        %v1876 = vsub.s32 %v1873, %v1875
        %v1877 = vrot.slane %v1802, %v1876
        %v1878 = vadd.s32 %v1872, 4294967224
        %v1879 = vlaneseq
        %v1880 = vshrl.u32 %v1879, 7
        %v1881 = vsub.s32 %v1878, %v1880
        %v1882 = vrot.slane %v1805, %v1881
        %vm1883 = vcmask 654912
        %v1884 = vsel %vm1883, %v1882, %v1877
        %v1885 = vadd.s32 %v1872, 4294967216
        %v1886 = vlaneseq
        %v1887 = vshrl.u32 %v1886, 7
        %v1888 = vsub.s32 %v1885, %v1887
        %v1889 = vrot.slane %v1808, %v1888
        %vm1890 = vcmask 720512
        %v1891 = vsel %vm1890, %v1889, %v1884
        %v1892 = vadd.s32 %v1872, 4294967208
        %v1893 = vlaneseq
        %v1894 = vshrl.u32 %v1893, 7
        %v1895 = vsub.s32 %v1892, %v1894
        %v1896 = vrot.slane %v1811, %v1895
        %vm1897 = vcmask 786112
        %v1898 = vsel %vm1897, %v1896, %v1891
        %v1899 = vlaneseq
        %v1900 = vshrl.u32 %v1899, 7
        %v1901 = vsub.s32 %v1873, %v1900
        %v1902 = vrot.slane %v1814, %v1901
        %v1903 = vlaneseq
        %v1904 = vshrl.u32 %v1903, 7
        %v1905 = vsub.s32 %v1878, %v1904
        %v1906 = vrot.slane %v1817, %v1905
        %v1907 = vsel %vm1883, %v1906, %v1902
        %v1908 = vlaneseq
        %v1909 = vshrl.u32 %v1908, 7
        %v1910 = vsub.s32 %v1885, %v1909
        %v1911 = vrot.slane %v1820, %v1910
        %v1912 = vsel %vm1890, %v1911, %v1907
        %v1913 = vlaneseq
        %v1914 = vshrl.u32 %v1913, 7
        %v1915 = vsub.s32 %v1892, %v1914
        %v1916 = vrot.slane %v1823, %v1915
        %v1917 = vsel %vm1897, %v1916, %v1912
        %vm1918 = vcmask 1041409
        %v1919 = vsel %vm1918, %v1917, %v1898
        %vm1921 = vcmask 779776
        %1922 = vst.msk [vmem:[%s10] sm:$0x3] %vm1921, %v1919
        %v1931 = vadd.s32 %v1872, 4294967200
        %v1932 = vlaneseq
        %v1933 = vshrl.u32 %v1932, 7
        %v1934 = vsub.s32 %v1931, %v1933
        %v1935 = vrot.slane %v1834, %v1934
        %v1936 = vadd.s32 %v1872, 4294967192
        %v1937 = vlaneseq
        %v1938 = vshrl.u32 %v1937, 7
        %v1939 = vsub.s32 %v1936, %v1938
        %v1940 = vrot.slane %v1837, %v1939
        %vm1941 = vcmask 917312
        %v1942 = vsel %vm1941, %v1940, %v1935
        %v1943 = vadd.s32 %v1872, 4294967184
        %v1944 = vlaneseq
        %v1945 = vshrl.u32 %v1944, 7
        %v1946 = vsub.s32 %v1943, %v1945
        %v1947 = vrot.slane %v1840, %v1946
        %vm1948 = vcmask 982912
        %v1949 = vsel %vm1948, %v1947, %v1942
        %v1950 = vadd.s32 %v1872, 4294967176
        %v1951 = vlaneseq
        %v1952 = vshrl.u32 %v1951, 7
        %v1953 = vsub.s32 %v1950, %v1952
        %v1954 = vrot.slane %v1843, %v1953
        %vm1955 = vcmask 1048512
        %v1956 = vsel %vm1955, %v1954, %v1949
        %v1957 = vlaneseq
        %v1958 = vshrl.u32 %v1957, 7
        %v1959 = vsub.s32 %v1931, %v1958
        %v1960 = vrot.slane %v1846, %v1959
        %v1961 = vlaneseq
        %v1962 = vshrl.u32 %v1961, 7
        %v1963 = vsub.s32 %v1936, %v1962
        %v1964 = vrot.slane %v1849, %v1963
        %v1965 = vsel %vm1941, %v1964, %v1960
        %v1966 = vlaneseq
        %v1967 = vshrl.u32 %v1966, 7
        %v1968 = vsub.s32 %v1943, %v1967
        %v1969 = vrot.slane %v1852, %v1968
        %v1970 = vsel %vm1948, %v1969, %v1965
        %v1971 = vlaneseq
        %v1972 = vshrl.u32 %v1971, 7
        %v1973 = vsub.s32 %v1950, %v1972
        %v1974 = vrot.slane %v1855, %v1973
        %v1975 = vsel %vm1955, %v1974, %v1970
        %v1976 = vsel %vm1918, %v1975, %v1956
        %vm1978 = vcmask 1042176
        %1979 = vst.msk [vmem:[%s10] sm:$0x3] %vm1978, %v1976
      $region84: #{hete_gnn_forward.1} parent=59 // pred_fallthru
        _
      // Predicated region
      $region85: #{hete_gnn_forward.1} parent=59 // pred_check
        %p1980 = pneg %p291
      $region86: #{hete_gnn_forward.1} parent=59 // pred_check_branch
        %1982 = sbr.rel (%p1980) target = $region88
      $region87: #{hete_gnn_forward.1} parent=59 // pred_region
        _
      $region88: #{hete_gnn_forward.1} parent=59 // pred_fallthru
        _
      // Predicated region
      $region89: #{hete_gnn_forward.1} parent=59 // pred_check
        %p1983 = pneg %p291
      $region90: #{hete_gnn_forward.1} parent=59 // pred_check_branch
        %1985 = sbr.rel (%p1983) target = $region92
      $region91: #{hete_gnn_forward.1} parent=59 // pred_region
        _
      $region92: #{hete_gnn_forward.1} parent=59 // pred_fallthru
        _
    $region60: #{hete_gnn_forward.1} parent=5 // pred_fallthru
      _
    %p1986 = scmp.le.s32.totalorder 2, %s16
    // Predicated region
    $region93: #{hete_gnn_forward.1} parent=5 // pred_check
      %p1987 = pneg %p1986
    $region94: #{hete_gnn_forward.1} parent=5 // pred_check_branch
      %1989 = sbr.rel (%p1987) target = $region96
    $region95: #{hete_gnn_forward.1} parent=5 // pred_region
      %s1990 = ssub.s32 %s16, 2
    $region96: #{hete_gnn_forward.1} parent=5 // pred_fallthru
      _
  $region6: #{hete_gnn_forward.1} parent=0 // loop_footer
    %s20 = sadd.s32 1, %s16
  $region7: #{hete_gnn_forward.1} parent=0 // loop_footer_branch
    %15 = sbr.rel target = $region3
  $region8: #{hete_gnn_forward.1} parent=0 // loop_exit
    _

</llo_original>
